<compile_context>
chip_gen: v7x
topology: tpu7x:2x2x1
jax: 0.10.0
libtpu: 0.0.40
codegen_flags: <defaults>
</compile_context>

<pallas_src>
import math

import jax
import jax.numpy as jnp
import numpy as np
from jax import lax
from jax.experimental import pallas as pl
from jax.experimental.pallas import tpu as pltpu


# ---------------------------------------------------------------------------
# Feature probes: run EAGERLY at import (never inside a jit trace).  They pin
# down the pltpu.roll lane-rotate convention and pl.reciprocal availability on
# the current backend; if a probe fails we fall back to portable jnp code.
# ---------------------------------------------------------------------------
def _run_probe(kernel):
    x = np.arange(8 * 128, dtype=np.float32).reshape(8, 128)
    out = pl.pallas_call(
        kernel, out_shape=jax.ShapeDtypeStruct((8, 128), jnp.float32))(x)
    return x, np.asarray(jax.block_until_ready(out))


def _probe_roll():
    def k(x_ref, o_ref):
        o_ref[...] = pltpu.roll(x_ref[...], shift=3, axis=1)
    try:
        x, out = _run_probe(k)
        return bool(np.array_equal(out, np.roll(x, 3, axis=1)))
    except Exception:
        return False


def _probe_reciprocal():
    def k(x_ref, o_ref):
        o_ref[...] = pl.reciprocal(x_ref[...] + 2.0, approx=True)
    try:
        x, out = _run_probe(k)
        return bool(np.allclose(out, 1.0 / (x + 2.0), rtol=5e-3, atol=0.0))
    except Exception:
        return False


_USE_PLTPU_ROLL = _probe_roll()
_USE_PL_RECIPROCAL = _probe_reciprocal()


# ---------------------------------------------------------------------------
# In-kernel helpers.
# ---------------------------------------------------------------------------
def _silu(z):
    """SiLU: z * sigmoid(z).  The reciprocal runs on the EUP slot when available."""
    denom = 1.0 + jnp.exp(-z)
    if _USE_PL_RECIPROCAL:
        return z * pl.reciprocal(denom, approx=True)
    return z / denom


def _lane_roll(x, d, L):
    """Cyclic lane shift: out[:, i] = x[:, (i - d) % L]  (== jnp.roll(x, d, axis=1))."""
    d = d % L
    if d == 0:
        return x
    if _USE_PLTPU_ROLL:
        return pltpu.roll(x, shift=d, axis=1)          # single XLU rotate
    return jnp.concatenate([x[:, L - d:], x[:, :L - d]], axis=1)


def _dws_body(a, masks_ref, wd_ref, wp_ref, *, e, Wo, L):
    """Depthwise 3x3 (pad=1, expansion e) + pointwise 1x1 on an in-vreg (nin, L) slab.

    a:        (nin, L)       activations (already in vregs)
    masks_ref (9, L)         per-tap zero-padding border masks (center tap unused)
    wd_ref    (nin, e*9)     depthwise weights, column j*9 + tap
    wp_ref    (nout, e*nin)  pointwise weights, column j*nin + c
    """
    # Initialize each expansion slot with the (unshifted, unmasked) center tap.
    dw = [wd_ref[:, j * 9 + 4:j * 9 + 5] * a for j in range(e)]
    for kh in range(3):
        for kw in range(3):
            tap = kh * 3 + kw
            if tap == 4:                                # center tap already accumulated
                continue
            s = (kh - 1) * Wo + (kw - 1)                # flat offset of this tap
            shifted = _lane_roll(a, -s, L) * masks_ref[tap:tap + 1, :]
            for j in range(e):
                dw[j] = dw[j] + wd_ref[:, j * 9 + tap:j * 9 + tap + 1] * shifted
    # Single MXU push for the pointwise conv over all expansion slots.
    dw_cat = jnp.concatenate(dw, axis=0)                # (e*nin, L)
    return jnp.dot(wp_ref[...], dw_cat, preferred_element_type=jnp.float32)


# ---------------------------------------------------------------------------
# Parameter helpers.
# ---------------------------------------------------------------------------
def _fold_bn(bn):
    scale = bn['gamma'] / jnp.sqrt(bn['var'] + bn['eps'])
    shift = bn['beta'] - bn['mean'] * scale
    return scale, shift


def _dws_weight_mats(wd, wp, nin, nout, e):
    """PyTorch DepthwiseSeparable weights -> kernel layouts."""
    # depthwise (nin*e, 1, 3, 3), out channel c*e + j  ->  (nin, e*9), column j*9 + tap
    wd_mat = wd.reshape(nin, e * 9).astype(jnp.float32)
    # pointwise (nout, nin*e, 1, 1), in channel c*e + j ->  (nout, e*nin), column j*nin + c
    wp_cat = jnp.transpose(wp.reshape(nout, nin, e), (0, 2, 1)).reshape(nout, e * nin)
    return wd_mat, wp_cat.astype(jnp.float32)


def _dws_tap_masks(Ho, Wo, N):
    """(9, N*Ho*Wo) zero-padding masks for the 3x3 taps, tiled over the batch."""
    m = np.zeros((9, Ho, Wo), np.float32)
    for kh in range(3):
        for kw in range(3):
            oh, ow = kh - 1, kw - 1
            m[kh * 3 + kw,
              max(0, -oh):Ho - max(0, oh),
              max(0, -ow):Wo - max(0, ow)] = 1.0
    return jnp.asarray(np.tile(m.reshape(9, Ho * Wo), (1, N)))


def _stem_masks(Ho, Wo, N):
    row = np.ones((Ho, Wo), np.float32)
    row[0, :] = 0.0                       # taps that read output-row ho-1
    col = np.ones((Ho, Wo), np.float32)
    col[:, 0] = 0.0                       # taps that read output-col wo-1
    tile = lambda a: jnp.asarray(np.tile(a.reshape(1, -1), (1, N)))
    return tile(row), tile(col)


# ---------------------------------------------------------------------------
# Kernel 1: fused stem = ConvBasic(3x3, stride 2, pad 1) + BatchNorm + SiLU.
# ---------------------------------------------------------------------------
def _make_stem_kernel(Wo, L):
    def kernel(pee_ref, peo_ref, poe_ref, poo_ref, rowm_ref, colm_ref,
               w_ref, shift_ref, o_ref):
        pee, peo = pee_ref[...], peo_ref[...]
        poe, poo = poe_ref[...], poo_ref[...]
        rm, cm = rowm_ref[...], colm_ref[...]           # (1, L) border masks

        # 3x3 stride-2 taps expressed on the four polyphase slabs.  Output pixel
        # (ho, wo) needs x[2ho+kh-1, 2wo+kw-1]; with even H, W only the low-side
        # borders (ho==0 / wo==0) fall outside the image.
        taps = [
            _lane_roll(poo, Wo + 1, L) * rm * cm,       # (0,0): P_oo[ho-1, wo-1]
            _lane_roll(poe, Wo, L) * rm,                # (0,1): P_oe[ho-1, wo]
            _lane_roll(poo, Wo, L) * rm,                # (0,2): P_oo[ho-1, wo]
            _lane_roll(peo, 1, L) * cm,                 # (1,0): P_eo[ho,   wo-1]
            pee,                                        # (1,1): P_ee[ho,   wo]
            peo,                                        # (1,2): P_eo[ho,   wo]
            _lane_roll(poo, 1, L) * cm,                 # (2,0): P_oo[ho,   wo-1]
            poe,                                        # (2,1): P_oe[ho,   wo]
            poo,                                        # (2,2): P_oo[ho,   wo]
        ]
        im2col = jnp.concatenate(taps, axis=0)          # (9*c1p, L) -- VMEM only
        z = jnp.dot(w_ref[...], im2col, preferred_element_type=jnp.float32)
        o_ref[...] = _silu(z + shift_ref[...]).astype(o_ref.dtype)
    return kernel


def stem_fused(x, w, bn, *, sublane=8):
    """ConvBasic stem.  x: (N, c1, H, W) -> (c2h, N*Ho*Wo) lane-dense slab."""
    N, c1, H, W = x.shape
    assert H % 2 == 0 and W % 2 == 0, "Pallas CSP stem assumes even spatial dims"
    Ho, Wo = H // 2, W // 2
    L = N * Ho * Wo
    c2h = w.shape[0]
    c1p = ((c1 + sublane - 1) // sublane) * sublane     # sublane-aligned channel pad

    def phase(ro, co):                                  # polyphase slab, channel-padded
        p = jnp.transpose(x[:, :, ro::2, co::2], (1, 0, 2, 3)).reshape(c1, L)
        return jnp.pad(p, ((0, c1p - c1), (0, 0)))
    pee, peo, poe, poo = phase(0, 0), phase(0, 1), phase(1, 0), phase(1, 1)

    # Fold the BN scale into the conv weight and reorder columns to the in-kernel
    # im2col row order (tap-major, then input channel).
    scale, shift = _fold_bn(bn)
    w4 = jnp.pad(jnp.transpose(w, (0, 2, 3, 1)),        # (c2h, kh, kw, c1) -> pad ci
                 ((0, 0), (0, 0), (0, 0), (0, c1p - c1)))
    w_mat = (w4.reshape(c2h, 9 * c1p) * scale[:, None]).astype(jnp.float32)
    shift = shift.reshape(c2h, 1).astype(jnp.float32)

    rowm, colm = _stem_masks(Ho, Wo, N)

    flops = L * (2 * c2h * 9 * c1p + 12 * c1p + 6 * c2h)
    bytes_accessed = 4 * (4 * c1p * L + c2h * L + c2h * 9 * c1p)
    return pl.pallas_call(
        _make_stem_kernel(Wo, L),
        out_shape=jax.ShapeDtypeStruct((c2h, L), jnp.float32),
        cost_estimate=pl.CostEstimate(flops=int(flops), transcendentals=int(c2h * L),
                                      bytes_accessed=int(bytes_accessed)),
    )(pee, peo, poe, poo, rowm, colm, w_mat, shift)


# ---------------------------------------------------------------------------
# Kernel 2: fused DepthwiseSeparable (+ optional residual add).
# ---------------------------------------------------------------------------
def _make_dws_kernel(e, Wo, L, add_res):
    def kernel(x_ref, masks_ref, wd_ref, wp_ref, *rest):
        if add_res:
            res_ref, o_ref = rest
        else:
            (o_ref,) = rest
        out = _dws_body(x_ref[...], masks_ref, wd_ref, wp_ref, e=e, Wo=Wo, L=L)
        if add_res:
            out = out + res_ref[...]
        o_ref[...] = out.astype(o_ref.dtype)
    return kernel


def dws_fused(x, wd, wp, Wo, masks, *, e=2, residual=None):
    """DepthwiseSeparable: x (nin, L) -> (nout, L); one HBM read + one HBM write."""
    nin, L = x.shape
    nout = wp.shape[0]
    wd_mat, wp_cat = _dws_weight_mats(wd, wp, nin, nout, e)

    add_res = residual is not None
    args = [x, masks, wd_mat, wp_cat] + ([residual] if add_res else [])

    flops = L * (18 * e * nin + 2 * nout * e * nin + (nout if add_res else 0))
    bytes_accessed = 4 * ((nin + nout + 9 + (nout if add_res else 0)) * L
                          + nin * e * 9 + nout * e * nin)
    return pl.pallas_call(
        _make_dws_kernel(e, Wo, L, add_res),
        out_shape=jax.ShapeDtypeStruct((nout, L), jnp.float32),
        cost_estimate=pl.CostEstimate(flops=int(flops), transcendentals=0,
                                      bytes_accessed=int(bytes_accessed)),
    )(*args)


# ---------------------------------------------------------------------------
# Kernel 3: fused CSP tail = conv3(t) | conv2(xs) -> concat -> BN -> SiLU -> conv4 DWS.
# ---------------------------------------------------------------------------
def _make_tail_kernel(e, Wo, L):
    def kernel(t_ref, xs_ref, w12_ref, shift_ref, masks_ref, wd_ref, wp_ref, o_ref):
        # y1 = conv3(t), y2 = conv2(xs) and the channel concat as one block-diagonal
        # matmul (BN scale already folded into w12), then BN shift + SiLU, then the
        # conv4 DepthwiseSeparable -- no intermediate ever touches HBM.
        txs = jnp.concatenate([t_ref[...], xs_ref[...]], axis=0)
        z = jnp.dot(w12_ref[...], txs, preferred_element_type=jnp.float32)
        a = _silu(z + shift_ref[...])
        out = _dws_body(a, masks_ref, wd_ref, wp_ref, e=e, Wo=Wo, L=L)
        o_ref[...] = out.astype(o_ref.dtype)
    return kernel


def csp_tail_fused(t, xs, w3, w2, bn, wd, wp, Wo, masks, *, e=2):
    c_, L = t.shape
    c2h = xs.shape[0]
    nin = 2 * c_                              # channels entering conv4
    nout = wp.shape[0]

    scale, shift = _fold_bn(bn)
    w3s = w3.reshape(c_, c_) * scale[:c_, None]
    w2s = w2.reshape(c_, c2h) * scale[c_:, None]
    zeros = lambda r, c: jnp.zeros((r, c), jnp.float32)
    w12 = jnp.concatenate(
        [jnp.concatenate([w3s, zeros(c_, c2h)], axis=1),
         jnp.concatenate([zeros(c_, c_), w2s], axis=1)], axis=0)   # (2c_, c_ + c2h)
    shift = shift.reshape(nin, 1).astype(jnp.float32)

    wd_mat, wp_cat = _dws_weight_mats(wd, wp, nin, nout, e)

    flops = L * (2 * nin * (c_ + c2h) + 6 * nin + 18 * e * nin + 2 * nout * e * nin)
    bytes_accessed = 4 * ((c_ + c2h + nout + 9) * L + nin * (c_ + c2h)
                          + nin * e * 9 + nout * e * nin)
    return pl.pallas_call(
        _make_tail_kernel(e, Wo, L),
        out_shape=jax.ShapeDtypeStruct((nout, L), jnp.float32),
        cost_estimate=pl.CostEstimate(flops=int(flops), transcendentals=int(nin * L),
                                      bytes_accessed=int(bytes_accessed)),
    )(t, xs, w12.astype(jnp.float32), shift, masks, wd_mat, wp_cat)


# ---------------------------------------------------------------------------
# CSPBottleNeck forward (Pallas) + parameter init + pure-JAX reference.
# ---------------------------------------------------------------------------
def csp_bottleneck_forward(x, params):
    """Pallas forward.  x: (N, c1, H, W) -> (N, c2, H//2, W//2)."""
    N, _, H, W = x.shape
    c2 = params['conv4']['wp'].shape[0]
    Ho, Wo = H // 2, W // 2

    # Stem: 3x3 stride-2 conv + BN + SiLU (im2col formed in-kernel from polyphase slabs).
    xs = stem_fused(x, params['stem_w'], params['stem_bn'])           # (c2//2, N*Ho*Wo)

    masks = _dws_tap_masks(Ho, Wo, N)

    # CSP body: conv1, then n BottleNecks (the shortcut add is fused into each 2nd dws).
    t = dws_fused(xs, params['conv1']['wd'], params['conv1']['wp'], Wo, masks)
    for blk in params['m']:
        b = dws_fused(t, blk['conv1']['wd'], blk['conv1']['wp'], Wo, masks)
        t = dws_fused(b, blk['conv2']['wd'], blk['conv2']['wp'], Wo, masks, residual=t)

    # Tail: conv3/conv2 + concat + BN + SiLU + conv4 dws, all in one fused kernel.
    out = csp_tail_fused(t, xs, params['conv3_w'], params['conv2_w'], params['mid_bn'],
                         params['conv4']['wd'], params['conv4']['wp'], Wo, masks)

    return jnp.transpose(out.reshape(c2, N, Ho, Wo), (1, 0, 2, 3))


def init_csp_params(key, c1, c2, n=1):
    e_dws = 2
    c_half = c2 // 2
    c_ = int(c2 * 0.5)

    def conv_w(k, cout, cin_per_group, ksz):
        bound = 1.0 / math.sqrt(cin_per_group * ksz * ksz)
        return jax.random.uniform(k, (cout, cin_per_group, ksz, ksz),
                                  jnp.float32, -bound, bound)

    def bn_p(k, c):
        k1, k2, k3, k4 = jax.random.split(k, 4)
        return dict(gamma=jax.random.uniform(k1, (c,), jnp.float32, 0.5, 1.5),
                    beta=0.1 * jax.random.normal(k2, (c,), jnp.float32),
                    mean=0.1 * jax.random.normal(k3, (c,), jnp.float32),
                    var=jax.random.uniform(k4, (c,), jnp.float32, 0.5, 1.5),
                    eps=1e-5)

    def dws_p(k, nin, nout):
        k1, k2 = jax.random.split(k)
        return dict(wd=conv_w(k1, nin * e_dws, 1, 3),        # depthwise, groups=nin
                    wp=conv_w(k2, nout, nin * e_dws, 1))     # pointwise 1x1

    keys = list(jax.random.split(key, 8 + 2 * n))
    return dict(
        stem_w=conv_w(keys[0], c_half, c1, 3),
        stem_bn=bn_p(keys[1], c_half),
        conv1=dws_p(keys[2], c_half, c_),
        conv2_w=conv_w(keys[3], c_, c_half, 1),
        conv3_w=conv_w(keys[4], c_, c_, 1),
        conv4=dws_p(keys[5], 2 * c_, c2),
        mid_bn=bn_p(keys[6], 2 * c_),
        m=[dict(conv1=dws_p(keys[7 + 2 * i], c_, c_),
                conv2=dws_p(keys[8 + 2 * i], c_, c_)) for i in range(n)],
    )


# --- plain-JAX reference (mirrors the PyTorch forward) ---
def _ref_conv(x, w, stride=1, pad=0, groups=1):
    return lax.conv_general_dilated(
        x, w, (stride, stride), ((pad, pad), (pad, pad)),
        dimension_numbers=('NCHW', 'OIHW', 'NCHW'),
        feature_group_count=groups,
        precision=lax.Precision.HIGHEST)


def _ref_bn_silu(x, bn):
    s, b = _fold_bn(bn)
    y = x * s[None, :, None, None] + b[None, :, None, None]
    return y * jax.nn.sigmoid(y)


def _ref_dws(x, p):
    y = _ref_conv(x, p['wd'], pad=1, groups=x.shape[1])
    return _ref_conv(y, p['wp'])


def csp_bottleneck_reference(x, params):
    xs = _ref_bn_silu(_ref_conv(x, params['stem_w'], stride=2, pad=1),
                      params['stem_bn'])
    t = _ref_dws(xs, params['conv1'])
    for blk in params['m']:
        t = t + _ref_dws(_ref_dws(t, blk['conv1']), blk['conv2'])
    y1 = _ref_conv(t, params['conv3_w'])
    y2 = _ref_conv(xs, params['conv2_w'])
    cat = jnp.concatenate([y1, y2], axis=1)
    return _ref_dws(_ref_bn_silu(cat, params['mid_bn']), params['conv4'])


if __name__ == "__main__":
    key = jax.random.PRNGKey(0)
    kx, kp = jax.random.split(key)

    # CSPBottleNeck(c1=4, c2=16, n=1); 16x16 input -> 8x8 feature maps, so the folded
    # (C, N*Ho*Wo) lane axis is exactly 2*8*8 = 128 lanes (one full vreg, lane-dense stores).
    N, c1, c2, H, W = 2, 4, 16, 16, 16
    x = jax.random.normal(kx, (N, c1, H, W), dtype=jnp.float32)
    params = init_csp_params(kp, c1, c2, n=1)

    fwd = jax.jit(csp_bottleneck_forward)
    out = jax.block_until_ready(fwd(x, params))

    ref = csp_bottleneck_reference(x, params)
    assert out.shape == (N, c2, H // 2, W // 2), out.shape
    err = float(jnp.max(jnp.abs(out - ref)))
    # 2e-2 headroom for the EUP approx-reciprocal in SiLU (exact path lands around 1e-5).
    assert jnp.allclose(out, ref, atol=2e-2, rtol=2e-2), err
    print("KERNEL_OK")
</pallas_src>

<mosaic_0001>
module attributes {stable_mosaic.version = 11 : i64} {
  func.func @k(%arg0: memref<8x128xf32, #tpu.memory_space<vmem>>, %arg1: memref<8x128xf32, #tpu.memory_space<vmem>>) attributes {dimension_semantics = [], scalar_prefetch = 0 : i64, scratch_operands = 0 : i64, tpu.core_type = #tpu.core_type<tc>} {
    %c0 = arith.constant 0 : index
    %c0_0 = arith.constant 0 : index
    %0 = vector.load %arg0[%c0, %c0_0] : memref<8x128xf32, #tpu.memory_space<vmem>>, vector<8x128xf32>
    %c3_i32 = arith.constant 3 : i32
    %1 = tpu.dynamic_rotate %0 by %c3_i32 dim 1 : vector<8x128xf32>, i32 -> vector<8x128xf32>
    %c0_1 = arith.constant 0 : index
    %c0_2 = arith.constant 0 : index
    %2 = vector.load %arg1[%c0_1, %c0_2] : memref<8x128xf32, #tpu.memory_space<vmem>>, vector<8x128xf32>
    tpu.vector_store %arg1[%c0_1, %c0_2], %1 {strides = array<i32>} : memref<8x128xf32, #tpu.memory_space<vmem>>, vector<8x128xf32>,
    return
  }
}

module attributes {stable_mosaic.version = 11 : i64} {
  func.func @k(%arg0: memref<8x128xf32, #tpu.memory_space<vmem>>, %arg1: memref<8x128xf32, #tpu.memory_space<vmem>>) attributes {dimension_semantics = [], scalar_prefetch = 0 : i64, scratch_operands = 0 : i64, tpu.core_type = #tpu.core_type<tc>} {
    %c0 = arith.constant 0 : index
    %c0_0 = arith.constant 0 : index
    %0 = vector.load %arg0[%c0, %c0_0] : memref<8x128xf32, #tpu.memory_space<vmem>>, vector<8x128xf32>
    %cst = arith.constant 2.000000e+00 : f32
    %1 = vector.broadcast %cst : f32 to vector<8x128xf32>
    %2 = arith.addf %0, %1 : vector<8x128xf32>
    %3 = tpu.reciprocal %2 {approx = true} : vector<8x128xf32> -> vector<8x128xf32>
    %c0_1 = arith.constant 0 : index
    %c0_2 = arith.constant 0 : index
    %4 = vector.load %arg1[%c0_1, %c0_2] : memref<8x128xf32, #tpu.memory_space<vmem>>, vector<8x128xf32>
    tpu.vector_store %arg1[%c0_1, %c0_2], %3 {strides = array<i32>} : memref<8x128xf32, #tpu.memory_space<vmem>>, vector<8x128xf32>,
    return
  }
}

module attributes {stable_mosaic.version = 11 : i64} {
  func.func @kernel(%arg0: memref<8x128xf32, #tpu.memory_space<vmem>>, %arg1: memref<8x128xf32, #tpu.memory_space<vmem>>, %arg2: memref<8x128xf32, #tpu.memory_space<vmem>>, %arg3: memref<8x128xf32, #tpu.memory_space<vmem>>, %arg4: memref<1x128xf32, #tpu.memory_space<vmem>>, %arg5: memref<1x128xf32, #tpu.memory_space<vmem>>, %arg6: memref<8x72xf32, #tpu.memory_space<vmem>>, %arg7: memref<8x1xf32, #tpu.memory_space<vmem>>, %arg8: memref<8x128xf32, #tpu.memory_space<vmem>>) attributes {dimension_semantics = [], scalar_prefetch = 0 : i64, scratch_operands = 0 : i64, tpu.core_type = #tpu.core_type<tc>} {
    %c0 = arith.constant 0 : index
    %c0_0 = arith.constant 0 : index
    %0 = vector.load %arg0[%c0, %c0_0] : memref<8x128xf32, #tpu.memory_space<vmem>>, vector<8x128xf32>
    %c0_1 = arith.constant 0 : index
    %c0_2 = arith.constant 0 : index
    %1 = vector.load %arg1[%c0_1, %c0_2] : memref<8x128xf32, #tpu.memory_space<vmem>>, vector<8x128xf32>
    %c0_3 = arith.constant 0 : index
    %c0_4 = arith.constant 0 : index
    %2 = vector.load %arg2[%c0_3, %c0_4] : memref<8x128xf32, #tpu.memory_space<vmem>>, vector<8x128xf32>
    %c0_5 = arith.constant 0 : index
    %c0_6 = arith.constant 0 : index
    %3 = vector.load %arg3[%c0_5, %c0_6] : memref<8x128xf32, #tpu.memory_space<vmem>>, vector<8x128xf32>
    %c0_7 = arith.constant 0 : index
    %c0_8 = arith.constant 0 : index
    %4 = vector.load %arg4[%c0_7, %c0_8] : memref<1x128xf32, #tpu.memory_space<vmem>>, vector<1x128xf32>
    %c0_9 = arith.constant 0 : index
    %c0_10 = arith.constant 0 : index
    %5 = vector.load %arg5[%c0_9, %c0_10] : memref<1x128xf32, #tpu.memory_space<vmem>>, vector<1x128xf32>
    %6 = vector.extract_strided_slice %3 {offsets = [0, 119], sizes = [8, 9], strides = [1, 1]} : vector<8x128xf32> to vector<8x9xf32>
    %7 = vector.extract_strided_slice %3 {offsets = [0, 0], sizes = [8, 119], strides = [1, 1]} : vector<8x128xf32> to vector<8x119xf32>
    %8 = tpu.concatenate %6, %7 in 1 : vector<8x9xf32>, vector<8x119xf32> -> vector<8x128xf32>
    %9 = vector.broadcast %4 : vector<1x128xf32> to vector<8x128xf32>
    %10 = arith.mulf %8, %9 : vector<8x128xf32>
    %11 = vector.broadcast %5 : vector<1x128xf32> to vector<8x128xf32>
    %12 = arith.mulf %10, %11 : vector<8x128xf32>
    %13 = vector.extract_strided_slice %2 {offsets = [0, 120], sizes = [8, 8], strides = [1, 1]} : vector<8x128xf32> to vector<8x8xf32>
    %14 = vector.extract_strided_slice %2 {offsets = [0, 0], sizes = [8, 120], strides = [1, 1]} : vector<8x128xf32> to vector<8x120xf32>
    %15 = tpu.concatenate %13, %14 in 1 : vector<8x8xf32>, vector<8x120xf32> -> vector<8x128xf32>
    %16 = vector.broadcast %4 : vector<1x128xf32> to vector<8x128xf32>
    %17 = arith.mulf %15, %16 : vector<8x128xf32>
    %18 = vector.extract_strided_slice %3 {offsets = [0, 120], sizes = [8, 8], strides = [1, 1]} : vector<8x128xf32> to vector<8x8xf32>
    %19 = vector.extract_strided_slice %3 {offsets = [0, 0], sizes = [8, 120], strides = [1, 1]} : vector<8x128xf32> to vector<8x120xf32>
    %20 = tpu.concatenate %18, %19 in 1 : vector<8x8xf32>, vector<8x120xf32> -> vector<8x128xf32>
    %21 = vector.broadcast %4 : vector<1x128xf32> to vector<8x128xf32>
    %22 = arith.mulf %20, %21 : vector<8x128xf32>
    %23 = vector.extract_strided_slice %1 {offsets = [0, 127], sizes = [8, 1], strides = [1, 1]} : vector<8x128xf32> to vector<8x1xf32>
    %24 = vector.extract_strided_slice %1 {offsets = [0, 0], sizes = [8, 127], strides = [1, 1]} : vector<8x128xf32> to vector<8x127xf32>
    %25 = tpu.concatenate %23, %24 in 1 : vector<8x1xf32>, vector<8x127xf32> -> vector<8x128xf32>
    %26 = vector.broadcast %5 : vector<1x128xf32> to vector<8x128xf32>
    %27 = arith.mulf %25, %26 : vector<8x128xf32>
    %28 = vector.extract_strided_slice %3 {offsets = [0, 127], sizes = [8, 1], strides = [1, 1]} : vector<8x128xf32> to vector<8x1xf32>
    %29 = vector.extract_strided_slice %3 {offsets = [0, 0], sizes = [8, 127], strides = [1, 1]} : vector<8x128xf32> to vector<8x127xf32>
    %30 = tpu.concatenate %28, %29 in 1 : vector<8x1xf32>, vector<8x127xf32> -> vector<8x128xf32>
    %31 = vector.broadcast %5 : vector<1x128xf32> to vector<8x128xf32>
    %32 = arith.mulf %30, %31 : vector<8x128xf32>
    %33 = tpu.concatenate %12, %17, %22, %27, %0, %1, %32, %2, %3 in 0 : vector<8x128xf32>, vector<8x128xf32>, vector<8x128xf32>, vector<8x128xf32>, vector<8x128xf32>, vector<8x128xf32>, vector<8x128xf32>, vector<8x128xf32>, vector<8x128xf32> -> vector<72x128xf32>
    %c0_11 = arith.constant 0 : index
    %c0_12 = arith.constant 0 : index
    %34 = vector.load %arg6[%c0_11, %c0_12] : memref<8x72xf32, #tpu.memory_space<vmem>>, vector<8x72xf32>
    %cst = arith.constant dense<0.000000e+00> : vector<8x128xf32>
    %35 = tpu.matmul %34, %33, %cst {dimension_numbers = #tpu.dot_dimension_numbers<[1], [0], [0], [1], [0, 0, 1, 1], [], []>} : vector<8x72xf32>, vector<72x128xf32>, vector<8x128xf32> -> vector<8x128xf32>
    %c0_13 = arith.constant 0 : index
    %c0_14 = arith.constant 0 : index
    %36 = vector.load %arg7[%c0_13, %c0_14] : memref<8x1xf32, #tpu.memory_space<vmem>>, vector<8x1xf32>
    %37 = vector.broadcast %36 : vector<8x1xf32> to vector<8x128xf32>
    %38 = arith.addf %35, %37 : vector<8x128xf32>
    %cst_15 = arith.constant 0.000000e+00 : f32
    %39 = vector.broadcast %cst_15 : f32 to vector<8x128xf32>
    %40 = arith.subf %39, %38 : vector<8x128xf32>
    %41 = math.exp %40 : vector<8x128xf32>
    %cst_16 = arith.constant 1.000000e+00 : f32
    %42 = vector.broadcast %cst_16 : f32 to vector<8x128xf32>
    %43 = arith.addf %42, %41 : vector<8x128xf32>
    %44 = arith.divf %38, %43 : vector<8x128xf32>
    %c0_17 = arith.constant 0 : index
    %c0_18 = arith.constant 0 : index
    %45 = vector.load %arg8[%c0_17, %c0_18] : memref<8x128xf32, #tpu.memory_space<vmem>>, vector<8x128xf32>
    tpu.vector_store %arg8[%c0_17, %c0_18], %44 {strides = array<i32>} : memref<8x128xf32, #tpu.memory_space<vmem>>, vector<8x128xf32>,
    return
  }
}

module attributes {stable_mosaic.version = 11 : i64} {
  func.func @kernel(%arg0: memref<8x128xf32, #tpu.memory_space<vmem>>, %arg1: memref<9x128xf32, #tpu.memory_space<vmem>>, %arg2: memref<8x18xf32, #tpu.memory_space<vmem>>, %arg3: memref<8x16xf32, #tpu.memory_space<vmem>>, %arg4: memref<8x128xf32, #tpu.memory_space<vmem>>) attributes {dimension_semantics = [], scalar_prefetch = 0 : i64, scratch_operands = 0 : i64, tpu.core_type = #tpu.core_type<tc>} {
    %c0 = arith.constant 0 : index
    %c0_0 = arith.constant 0 : index
    %0 = vector.load %arg0[%c0, %c0_0] : memref<8x128xf32, #tpu.memory_space<vmem>>, vector<8x128xf32>
    %c0_1 = arith.constant 0 : index
    %c4 = arith.constant 4 : index
    %1 = vector.load %arg2[%c0_1, %c4] : memref<8x18xf32, #tpu.memory_space<vmem>>, vector<8x1xf32>
    %2 = vector.broadcast %1 : vector<8x1xf32> to vector<8x128xf32>
    %3 = arith.mulf %2, %0 : vector<8x128xf32>
    %c0_2 = arith.constant 0 : index
    %c13 = arith.constant 13 : index
    %4 = vector.load %arg2[%c0_2, %c13] : memref<8x18xf32, #tpu.memory_space<vmem>>, vector<8x1xf32>
    %5 = vector.broadcast %4 : vector<8x1xf32> to vector<8x128xf32>
    %6 = arith.mulf %5, %0 : vector<8x128xf32>
    %7 = vector.extract_strided_slice %0 {offsets = [0, 119], sizes = [8, 9], strides = [1, 1]} : vector<8x128xf32> to vector<8x9xf32>
    %8 = vector.extract_strided_slice %0 {offsets = [0, 0], sizes = [8, 119], strides = [1, 1]} : vector<8x128xf32> to vector<8x119xf32>
    %9 = tpu.concatenate %7, %8 in 1 : vector<8x9xf32>, vector<8x119xf32> -> vector<8x128xf32>
    %c0_3 = arith.constant 0 : index
    %c0_4 = arith.constant 0 : index
    %10 = vector.load %arg1[%c0_3, %c0_4] : memref<9x128xf32, #tpu.memory_space<vmem>>, vector<1x128xf32>
    %11 = vector.broadcast %10 : vector<1x128xf32> to vector<8x128xf32>
    %12 = arith.mulf %9, %11 : vector<8x128xf32>
    %c0_5 = arith.constant 0 : index
    %c0_6 = arith.constant 0 : index
    %13 = vector.load %arg2[%c0_5, %c0_6] : memref<8x18xf32, #tpu.memory_space<vmem>>, vector<8x1xf32>
    %14 = vector.broadcast %13 : vector<8x1xf32> to vector<8x128xf32>
    %15 = arith.mulf %14, %12 : vector<8x128xf32>
    %16 = arith.addf %3, %15 : vector<8x128xf32>
    %c0_7 = arith.constant 0 : index
    %c9 = arith.constant 9 : index
    %17 = vector.load %arg2[%c0_7, %c9] : memref<8x18xf32, #tpu.memory_space<vmem>>, vector<8x1xf32>
    %18 = vector.broadcast %17 : vector<8x1xf32> to vector<8x128xf32>
    %19 = arith.mulf %18, %12 : vector<8x128xf32>
    %20 = arith.addf %6, %19 : vector<8x128xf32>
    %21 = vector.extract_strided_slice %0 {offsets = [0, 120], sizes = [8, 8], strides = [1, 1]} : vector<8x128xf32> to vector<8x8xf32>
    %22 = vector.extract_strided_slice %0 {offsets = [0, 0], sizes = [8, 120], strides = [1, 1]} : vector<8x128xf32> to vector<8x120xf32>
    %23 = tpu.concatenate %21, %22 in 1 : vector<8x8xf32>, vector<8x120xf32> -> vector<8x128xf32>
    %c1 = arith.constant 1 : index
    %c0_8 = arith.constant 0 : index
    %24 = vector.load %arg1[%c1, %c0_8] : memref<9x128xf32, #tpu.memory_space<vmem>>, vector<1x128xf32>
    %25 = vector.broadcast %24 : vector<1x128xf32> to vector<8x128xf32>
    %26 = arith.mulf %23, %25 : vector<8x128xf32>
    %c0_9 = arith.constant 0 : index
    %c1_10 = arith.constant 1 : index
    %27 = vector.load %arg2[%c0_9, %c1_10] : memref<8x18xf32, #tpu.memory_space<vmem>>, vector<8x1xf32>
    %28 = vector.broadcast %27 : vector<8x1xf32> to vector<8x128xf32>
    %29 = arith.mulf %28, %26 : vector<8x128xf32>
    %30 = arith.addf %16, %29 : vector<8x128xf32>
    %c0_11 = arith.constant 0 : index
    %c10 = arith.constant 10 : index
    %31 = vector.load %arg2[%c0_11, %c10] : memref<8x18xf32, #tpu.memory_space<vmem>>, vector<8x1xf32>
    %32 = vector.broadcast %31 : vector<8x1xf32> to vector<8x128xf32>
    %33 = arith.mulf %32, %26 : vector<8x128xf32>
    %34 = arith.addf %20, %33 : vector<8x128xf32>
    %35 = vector.extract_strided_slice %0 {offsets = [0, 121], sizes = [8, 7], strides = [1, 1]} : vector<8x128xf32> to vector<8x7xf32>
    %36 = vector.extract_strided_slice %0 {offsets = [0, 0], sizes = [8, 121], strides = [1, 1]} : vector<8x128xf32> to vector<8x121xf32>
    %37 = tpu.concatenate %35, %36 in 1 : vector<8x7xf32>, vector<8x121xf32> -> vector<8x128xf32>
    %c2 = arith.constant 2 : index
    %c0_12 = arith.constant 0 : index
    %38 = vector.load %arg1[%c2, %c0_12] : memref<9x128xf32, #tpu.memory_space<vmem>>, vector<1x128xf32>
    %39 = vector.broadcast %38 : vector<1x128xf32> to vector<8x128xf32>
    %40 = arith.mulf %37, %39 : vector<8x128xf32>
    %c0_13 = arith.constant 0 : index
    %c2_14 = arith.constant 2 : index
    %41 = vector.load %arg2[%c0_13, %c2_14] : memref<8x18xf32, #tpu.memory_space<vmem>>, vector<8x1xf32>
    %42 = vector.broadcast %41 : vector<8x1xf32> to vector<8x128xf32>
    %43 = arith.mulf %42, %40 : vector<8x128xf32>
    %44 = arith.addf %30, %43 : vector<8x128xf32>
    %c0_15 = arith.constant 0 : index
    %c11 = arith.constant 11 : index
    %45 = vector.load %arg2[%c0_15, %c11] : memref<8x18xf32, #tpu.memory_space<vmem>>, vector<8x1xf32>
    %46 = vector.broadcast %45 : vector<8x1xf32> to vector<8x128xf32>
    %47 = arith.mulf %46, %40 : vector<8x128xf32>
    %48 = arith.addf %34, %47 : vector<8x128xf32>
    %49 = vector.extract_strided_slice %0 {offsets = [0, 127], sizes = [8, 1], strides = [1, 1]} : vector<8x128xf32> to vector<8x1xf32>
    %50 = vector.extract_strided_slice %0 {offsets = [0, 0], sizes = [8, 127], strides = [1, 1]} : vector<8x128xf32> to vector<8x127xf32>
    %51 = tpu.concatenate %49, %50 in 1 : vector<8x1xf32>, vector<8x127xf32> -> vector<8x128xf32>
    %c3 = arith.constant 3 : index
    %c0_16 = arith.constant 0 : index
    %52 = vector.load %arg1[%c3, %c0_16] : memref<9x128xf32, #tpu.memory_space<vmem>>, vector<1x128xf32>
    %53 = vector.broadcast %52 : vector<1x128xf32> to vector<8x128xf32>
    %54 = arith.mulf %51, %53 : vector<8x128xf32>
    %c0_17 = arith.constant 0 : index
    %c3_18 = arith.constant 3 : index
    %55 = vector.load %arg2[%c0_17, %c3_18] : memref<8x18xf32, #tpu.memory_space<vmem>>, vector<8x1xf32>
    %56 = vector.broadcast %55 : vector<8x1xf32> to vector<8x128xf32>
    %57 = arith.mulf %56, %54 : vector<8x128xf32>
    %58 = arith.addf %44, %57 : vector<8x128xf32>
    %c0_19 = arith.constant 0 : index
    %c12 = arith.constant 12 : index
    %59 = vector.load %arg2[%c0_19, %c12] : memref<8x18xf32, #tpu.memory_space<vmem>>, vector<8x1xf32>
    %60 = vector.broadcast %59 : vector<8x1xf32> to vector<8x128xf32>
    %61 = arith.mulf %60, %54 : vector<8x128xf32>
    %62 = arith.addf %48, %61 : vector<8x128xf32>
    %63 = vector.extract_strided_slice %0 {offsets = [0, 1], sizes = [8, 127], strides = [1, 1]} : vector<8x128xf32> to vector<8x127xf32>
    %64 = vector.extract_strided_slice %0 {offsets = [0, 0], sizes = [8, 1], strides = [1, 1]} : vector<8x128xf32> to vector<8x1xf32>
    %65 = tpu.concatenate %63, %64 in 1 : vector<8x127xf32>, vector<8x1xf32> -> vector<8x128xf32>
    %c5 = arith.constant 5 : index
    %c0_20 = arith.constant 0 : index
    %66 = vector.load %arg1[%c5, %c0_20] : memref<9x128xf32, #tpu.memory_space<vmem>>, vector<1x128xf32>
    %67 = vector.broadcast %66 : vector<1x128xf32> to vector<8x128xf32>
    %68 = arith.mulf %65, %67 : vector<8x128xf32>
    %c0_21 = arith.constant 0 : index
    %c5_22 = arith.constant 5 : index
    %69 = vector.load %arg2[%c0_21, %c5_22] : memref<8x18xf32, #tpu.memory_space<vmem>>, vector<8x1xf32>
    %70 = vector.broadcast %69 : vector<8x1xf32> to vector<8x128xf32>
    %71 = arith.mulf %70, %68 : vector<8x128xf32>
    %72 = arith.addf %58, %71 : vector<8x128xf32>
    %c0_23 = arith.constant 0 : index
    %c14 = arith.constant 14 : index
    %73 = vector.load %arg2[%c0_23, %c14] : memref<8x18xf32, #tpu.memory_space<vmem>>, vector<8x1xf32>
    %74 = vector.broadcast %73 : vector<8x1xf32> to vector<8x128xf32>
    %75 = arith.mulf %74, %68 : vector<8x128xf32>
    %76 = arith.addf %62, %75 : vector<8x128xf32>
    %77 = vector.extract_strided_slice %0 {offsets = [0, 7], sizes = [8, 121], strides = [1, 1]} : vector<8x128xf32> to vector<8x121xf32>
    %78 = vector.extract_strided_slice %0 {offsets = [0, 0], sizes = [8, 7], strides = [1, 1]} : vector<8x128xf32> to vector<8x7xf32>
    %79 = tpu.concatenate %77, %78 in 1 : vector<8x121xf32>, vector<8x7xf32> -> vector<8x128xf32>
    %c6 = arith.constant 6 : index
    %c0_24 = arith.constant 0 : index
    %80 = vector.load %arg1[%c6, %c0_24] : memref<9x128xf32, #tpu.memory_space<vmem>>, vector<1x128xf32>
    %81 = vector.broadcast %80 : vector<1x128xf32> to vector<8x128xf32>
    %82 = arith.mulf %79, %81 : vector<8x128xf32>
    %c0_25 = arith.constant 0 : index
    %c6_26 = arith.constant 6 : index
    %83 = vector.load %arg2[%c0_25, %c6_26] : memref<8x18xf32, #tpu.memory_space<vmem>>, vector<8x1xf32>
    %84 = vector.broadcast %83 : vector<8x1xf32> to vector<8x128xf32>
    %85 = arith.mulf %84, %82 : vector<8x128xf32>
    %86 = arith.addf %72, %85 : vector<8x128xf32>
    %c0_27 = arith.constant 0 : index
    %c15 = arith.constant 15 : index
    %87 = vector.load %arg2[%c0_27, %c15] : memref<8x18xf32, #tpu.memory_space<vmem>>, vector<8x1xf32>
    %88 = vector.broadcast %87 : vector<8x1xf32> to vector<8x128xf32>
    %89 = arith.mulf %88, %82 : vector<8x128xf32>
    %90 = arith.addf %76, %89 : vector<8x128xf32>
    %91 = vector.extract_strided_slice %0 {offsets = [0, 8], sizes = [8, 120], strides = [1, 1]} : vector<8x128xf32> to vector<8x120xf32>
    %92 = vector.extract_strided_slice %0 {offsets = [0, 0], sizes = [8, 8], strides = [1, 1]} : vector<8x128xf32> to vector<8x8xf32>
    %93 = tpu.concatenate %91, %92 in 1 : vector<8x120xf32>, vector<8x8xf32> -> vector<8x128xf32>
    %c7 = arith.constant 7 : index
    %c0_28 = arith.constant 0 : index
    %94 = vector.load %arg1[%c7, %c0_28] : memref<9x128xf32, #tpu.memory_space<vmem>>, vector<1x128xf32>
    %95 = vector.broadcast %94 : vector<1x128xf32> to vector<8x128xf32>
    %96 = arith.mulf %93, %95 : vector<8x128xf32>
    %c0_29 = arith.constant 0 : index
    %c7_30 = arith.constant 7 : index
    %97 = vector.load %arg2[%c0_29, %c7_30] : memref<8x18xf32, #tpu.memory_space<vmem>>, vector<8x1xf32>
    %98 = vector.broadcast %97 : vector<8x1xf32> to vector<8x128xf32>
    %99 = arith.mulf %98, %96 : vector<8x128xf32>
    %100 = arith.addf %86, %99 : vector<8x128xf32>
    %c0_31 = arith.constant 0 : index
    %c16 = arith.constant 16 : index
    %101 = vector.load %arg2[%c0_31, %c16] : memref<8x18xf32, #tpu.memory_space<vmem>>, vector<8x1xf32>
    %102 = vector.broadcast %101 : vector<8x1xf32> to vector<8x128xf32>
    %103 = arith.mulf %102, %96 : vector<8x128xf32>
    %104 = arith.addf %90, %103 : vector<8x128xf32>
    %105 = vector.extract_strided_slice %0 {offsets = [0, 9], sizes = [8, 119], strides = [1, 1]} : vector<8x128xf32> to vector<8x119xf32>
    %106 = vector.extract_strided_slice %0 {offsets = [0, 0], sizes = [8, 9], strides = [1, 1]} : vector<8x128xf32> to vector<8x9xf32>
    %107 = tpu.concatenate %105, %106 in 1 : vector<8x119xf32>, vector<8x9xf32> -> vector<8x128xf32>
    %c8 = arith.constant 8 : index
    %c0_32 = arith.constant 0 : index
    %108 = vector.load %arg1[%c8, %c0_32] : memref<9x128xf32, #tpu.memory_space<vmem>>, vector<1x128xf32>
    %109 = vector.broadcast %108 : vector<1x128xf32> to vector<8x128xf32>
    %110 = arith.mulf %107, %109 : vector<8x128xf32>
    %c0_33 = arith.constant 0 : index
    %c8_34 = arith.constant 8 : index
    %111 = vector.load %arg2[%c0_33, %c8_34] : memref<8x18xf32, #tpu.memory_space<vmem>>, vector<8x1xf32>
    %112 = vector.broadcast %111 : vector<8x1xf32> to vector<8x128xf32>
    %113 = arith.mulf %112, %110 : vector<8x128xf32>
    %114 = arith.addf %100, %113 : vector<8x128xf32>
    %c0_35 = arith.constant 0 : index
    %c17 = arith.constant 17 : index
    %115 = vector.load %arg2[%c0_35, %c17] : memref<8x18xf32, #tpu.memory_space<vmem>>, vector<8x1xf32>
    %116 = vector.broadcast %115 : vector<8x1xf32> to vector<8x128xf32>
    %117 = arith.mulf %116, %110 : vector<8x128xf32>
    %118 = arith.addf %104, %117 : vector<8x128xf32>
    %119 = tpu.concatenate %114, %118 in 0 : vector<8x128xf32>, vector<8x128xf32> -> vector<16x128xf32>
    %c0_36 = arith.constant 0 : index
    %c0_37 = arith.constant 0 : index
    %120 = vector.load %arg3[%c0_36, %c0_37] : memref<8x16xf32, #tpu.memory_space<vmem>>, vector<8x16xf32>
    %cst = arith.constant dense<0.000000e+00> : vector<8x128xf32>
    %121 = tpu.matmul %120, %119, %cst {dimension_numbers = #tpu.dot_dimension_numbers<[1], [0], [0], [1], [0, 0, 1, 1], [], []>} : vector<8x16xf32>, vector<16x128xf32>, vector<8x128xf32> -> vector<8x128xf32>
    %c0_38 = arith.constant 0 : index
    %c0_39 = arith.constant 0 : index
    %122 = vector.load %arg4[%c0_38, %c0_39] : memref<8x128xf32, #tpu.memory_space<vmem>>, vector<8x128xf32>
    tpu.vector_store %arg4[%c0_38, %c0_39], %121 {strides = array<i32>} : memref<8x128xf32, #tpu.memory_space<vmem>>, vector<8x128xf32>,
    return
  }
}

module attributes {stable_mosaic.version = 11 : i64} {
  func.func @kernel(%arg0: memref<8x128xf32, #tpu.memory_space<vmem>>, %arg1: memref<9x128xf32, #tpu.memory_space<vmem>>, %arg2: memref<8x18xf32, #tpu.memory_space<vmem>>, %arg3: memref<8x16xf32, #tpu.memory_space<vmem>>, %arg4: memref<8x128xf32, #tpu.memory_space<vmem>>, %arg5: memref<8x128xf32, #tpu.memory_space<vmem>>) attributes {dimension_semantics = [], scalar_prefetch = 0 : i64, scratch_operands = 0 : i64, tpu.core_type = #tpu.core_type<tc>} {
    %c0 = arith.constant 0 : index
    %c0_0 = arith.constant 0 : index
    %0 = vector.load %arg0[%c0, %c0_0] : memref<8x128xf32, #tpu.memory_space<vmem>>, vector<8x128xf32>
    %c0_1 = arith.constant 0 : index
    %c4 = arith.constant 4 : index
    %1 = vector.load %arg2[%c0_1, %c4] : memref<8x18xf32, #tpu.memory_space<vmem>>, vector<8x1xf32>
    %2 = vector.broadcast %1 : vector<8x1xf32> to vector<8x128xf32>
    %3 = arith.mulf %2, %0 : vector<8x128xf32>
    %c0_2 = arith.constant 0 : index
    %c13 = arith.constant 13 : index
    %4 = vector.load %arg2[%c0_2, %c13] : memref<8x18xf32, #tpu.memory_space<vmem>>, vector<8x1xf32>
    %5 = vector.broadcast %4 : vector<8x1xf32> to vector<8x128xf32>
    %6 = arith.mulf %5, %0 : vector<8x128xf32>
    %7 = vector.extract_strided_slice %0 {offsets = [0, 119], sizes = [8, 9], strides = [1, 1]} : vector<8x128xf32> to vector<8x9xf32>
    %8 = vector.extract_strided_slice %0 {offsets = [0, 0], sizes = [8, 119], strides = [1, 1]} : vector<8x128xf32> to vector<8x119xf32>
    %9 = tpu.concatenate %7, %8 in 1 : vector<8x9xf32>, vector<8x119xf32> -> vector<8x128xf32>
    %c0_3 = arith.constant 0 : index
    %c0_4 = arith.constant 0 : index
    %10 = vector.load %arg1[%c0_3, %c0_4] : memref<9x128xf32, #tpu.memory_space<vmem>>, vector<1x128xf32>
    %11 = vector.broadcast %10 : vector<1x128xf32> to vector<8x128xf32>
    %12 = arith.mulf %9, %11 : vector<8x128xf32>
    %c0_5 = arith.constant 0 : index
    %c0_6 = arith.constant 0 : index
    %13 = vector.load %arg2[%c0_5, %c0_6] : memref<8x18xf32, #tpu.memory_space<vmem>>, vector<8x1xf32>
    %14 = vector.broadcast %13 : vector<8x1xf32> to vector<8x128xf32>
    %15 = arith.mulf %14, %12 : vector<8x128xf32>
    %16 = arith.addf %3, %15 : vector<8x128xf32>
    %c0_7 = arith.constant 0 : index
    %c9 = arith.constant 9 : index
    %17 = vector.load %arg2[%c0_7, %c9] : memref<8x18xf32, #tpu.memory_space<vmem>>, vector<8x1xf32>
    %18 = vector.broadcast %17 : vector<8x1xf32> to vector<8x128xf32>
    %19 = arith.mulf %18, %12 : vector<8x128xf32>
    %20 = arith.addf %6, %19 : vector<8x128xf32>
    %21 = vector.extract_strided_slice %0 {offsets = [0, 120], sizes = [8, 8], strides = [1, 1]} : vector<8x128xf32> to vector<8x8xf32>
    %22 = vector.extract_strided_slice %0 {offsets = [0, 0], sizes = [8, 120], strides = [1, 1]} : vector<8x128xf32> to vector<8x120xf32>
    %23 = tpu.concatenate %21, %22 in 1 : vector<8x8xf32>, vector<8x120xf32> -> vector<8x128xf32>
    %c1 = arith.constant 1 : index
    %c0_8 = arith.constant 0 : index
    %24 = vector.load %arg1[%c1, %c0_8] : memref<9x128xf32, #tpu.memory_space<vmem>>, vector<1x128xf32>
    %25 = vector.broadcast %24 : vector<1x128xf32> to vector<8x128xf32>
    %26 = arith.mulf %23, %25 : vector<8x128xf32>
    %c0_9 = arith.constant 0 : index
    %c1_10 = arith.constant 1 : index
    %27 = vector.load %arg2[%c0_9, %c1_10] : memref<8x18xf32, #tpu.memory_space<vmem>>, vector<8x1xf32>
    %28 = vector.broadcast %27 : vector<8x1xf32> to vector<8x128xf32>
    %29 = arith.mulf %28, %26 : vector<8x128xf32>
    %30 = arith.addf %16, %29 : vector<8x128xf32>
    %c0_11 = arith.constant 0 : index
    %c10 = arith.constant 10 : index
    %31 = vector.load %arg2[%c0_11, %c10] : memref<8x18xf32, #tpu.memory_space<vmem>>, vector<8x1xf32>
    %32 = vector.broadcast %31 : vector<8x1xf32> to vector<8x128xf32>
    %33 = arith.mulf %32, %26 : vector<8x128xf32>
    %34 = arith.addf %20, %33 : vector<8x128xf32>
    %35 = vector.extract_strided_slice %0 {offsets = [0, 121], sizes = [8, 7], strides = [1, 1]} : vector<8x128xf32> to vector<8x7xf32>
    %36 = vector.extract_strided_slice %0 {offsets = [0, 0], sizes = [8, 121], strides = [1, 1]} : vector<8x128xf32> to vector<8x121xf32>
    %37 = tpu.concatenate %35, %36 in 1 : vector<8x7xf32>, vector<8x121xf32> -> vector<8x128xf32>
    %c2 = arith.constant 2 : index
    %c0_12 = arith.constant 0 : index
    %38 = vector.load %arg1[%c2, %c0_12] : memref<9x128xf32, #tpu.memory_space<vmem>>, vector<1x128xf32>
    %39 = vector.broadcast %38 : vector<1x128xf32> to vector<8x128xf32>
    %40 = arith.mulf %37, %39 : vector<8x128xf32>
    %c0_13 = arith.constant 0 : index
    %c2_14 = arith.constant 2 : index
    %41 = vector.load %arg2[%c0_13, %c2_14] : memref<8x18xf32, #tpu.memory_space<vmem>>, vector<8x1xf32>
    %42 = vector.broadcast %41 : vector<8x1xf32> to vector<8x128xf32>
    %43 = arith.mulf %42, %40 : vector<8x128xf32>
    %44 = arith.addf %30, %43 : vector<8x128xf32>
    %c0_15 = arith.constant 0 : index
    %c11 = arith.constant 11 : index
    %45 = vector.load %arg2[%c0_15, %c11] : memref<8x18xf32, #tpu.memory_space<vmem>>, vector<8x1xf32>
    %46 = vector.broadcast %45 : vector<8x1xf32> to vector<8x128xf32>
    %47 = arith.mulf %46, %40 : vector<8x128xf32>
    %48 = arith.addf %34, %47 : vector<8x128xf32>
    %49 = vector.extract_strided_slice %0 {offsets = [0, 127], sizes = [8, 1], strides = [1, 1]} : vector<8x128xf32> to vector<8x1xf32>
    %50 = vector.extract_strided_slice %0 {offsets = [0, 0], sizes = [8, 127], strides = [1, 1]} : vector<8x128xf32> to vector<8x127xf32>
    %51 = tpu.concatenate %49, %50 in 1 : vector<8x1xf32>, vector<8x127xf32> -> vector<8x128xf32>
    %c3 = arith.constant 3 : index
    %c0_16 = arith.constant 0 : index
    %52 = vector.load %arg1[%c3, %c0_16] : memref<9x128xf32, #tpu.memory_space<vmem>>, vector<1x128xf32>
    %53 = vector.broadcast %52 : vector<1x128xf32> to vector<8x128xf32>
    %54 = arith.mulf %51, %53 : vector<8x128xf32>
    %c0_17 = arith.constant 0 : index
    %c3_18 = arith.constant 3 : index
    %55 = vector.load %arg2[%c0_17, %c3_18] : memref<8x18xf32, #tpu.memory_space<vmem>>, vector<8x1xf32>
    %56 = vector.broadcast %55 : vector<8x1xf32> to vector<8x128xf32>
    %57 = arith.mulf %56, %54 : vector<8x128xf32>
    %58 = arith.addf %44, %57 : vector<8x128xf32>
    %c0_19 = arith.constant 0 : index
    %c12 = arith.constant 12 : index
    %59 = vector.load %arg2[%c0_19, %c12] : memref<8x18xf32, #tpu.memory_space<vmem>>, vector<8x1xf32>
    %60 = vector.broadcast %59 : vector<8x1xf32> to vector<8x128xf32>
    %61 = arith.mulf %60, %54 : vector<8x128xf32>
    %62 = arith.addf %48, %61 : vector<8x128xf32>
    %63 = vector.extract_strided_slice %0 {offsets = [0, 1], sizes = [8, 127], strides = [1, 1]} : vector<8x128xf32> to vector<8x127xf32>
    %64 = vector.extract_strided_slice %0 {offsets = [0, 0], sizes = [8, 1], strides = [1, 1]} : vector<8x128xf32> to vector<8x1xf32>
    %65 = tpu.concatenate %63, %64 in 1 : vector<8x127xf32>, vector<8x1xf32> -> vector<8x128xf32>
    %c5 = arith.constant 5 : index
    %c0_20 = arith.constant 0 : index
    %66 = vector.load %arg1[%c5, %c0_20] : memref<9x128xf32, #tpu.memory_space<vmem>>, vector<1x128xf32>
    %67 = vector.broadcast %66 : vector<1x128xf32> to vector<8x128xf32>
    %68 = arith.mulf %65, %67 : vector<8x128xf32>
    %c0_21 = arith.constant 0 : index
    %c5_22 = arith.constant 5 : index
    %69 = vector.load %arg2[%c0_21, %c5_22] : memref<8x18xf32, #tpu.memory_space<vmem>>, vector<8x1xf32>
    %70 = vector.broadcast %69 : vector<8x1xf32> to vector<8x128xf32>
    %71 = arith.mulf %70, %68 : vector<8x128xf32>
    %72 = arith.addf %58, %71 : vector<8x128xf32>
    %c0_23 = arith.constant 0 : index
    %c14 = arith.constant 14 : index
    %73 = vector.load %arg2[%c0_23, %c14] : memref<8x18xf32, #tpu.memory_space<vmem>>, vector<8x1xf32>
    %74 = vector.broadcast %73 : vector<8x1xf32> to vector<8x128xf32>
    %75 = arith.mulf %74, %68 : vector<8x128xf32>
    %76 = arith.addf %62, %75 : vector<8x128xf32>
    %77 = vector.extract_strided_slice %0 {offsets = [0, 7], sizes = [8, 121], strides = [1, 1]} : vector<8x128xf32> to vector<8x121xf32>
    %78 = vector.extract_strided_slice %0 {offsets = [0, 0], sizes = [8, 7], strides = [1, 1]} : vector<8x128xf32> to vector<8x7xf32>
    %79 = tpu.concatenate %77, %78 in 1 : vector<8x121xf32>, vector<8x7xf32> -> vector<8x128xf32>
    %c6 = arith.constant 6 : index
    %c0_24 = arith.constant 0 : index
    %80 = vector.load %arg1[%c6, %c0_24] : memref<9x128xf32, #tpu.memory_space<vmem>>, vector<1x128xf32>
    %81 = vector.broadcast %80 : vector<1x128xf32> to vector<8x128xf32>
    %82 = arith.mulf %79, %81 : vector<8x128xf32>
    %c0_25 = arith.constant 0 : index
    %c6_26 = arith.constant 6 : index
    %83 = vector.load %arg2[%c0_25, %c6_26] : memref<8x18xf32, #tpu.memory_space<vmem>>, vector<8x1xf32>
    %84 = vector.broadcast %83 : vector<8x1xf32> to vector<8x128xf32>
    %85 = arith.mulf %84, %82 : vector<8x128xf32>
    %86 = arith.addf %72, %85 : vector<8x128xf32>
    %c0_27 = arith.constant 0 : index
    %c15 = arith.constant 15 : index
    %87 = vector.load %arg2[%c0_27, %c15] : memref<8x18xf32, #tpu.memory_space<vmem>>, vector<8x1xf32>
    %88 = vector.broadcast %87 : vector<8x1xf32> to vector<8x128xf32>
    %89 = arith.mulf %88, %82 : vector<8x128xf32>
    %90 = arith.addf %76, %89 : vector<8x128xf32>
    %91 = vector.extract_strided_slice %0 {offsets = [0, 8], sizes = [8, 120], strides = [1, 1]} : vector<8x128xf32> to vector<8x120xf32>
    %92 = vector.extract_strided_slice %0 {offsets = [0, 0], sizes = [8, 8], strides = [1, 1]} : vector<8x128xf32> to vector<8x8xf32>
    %93 = tpu.concatenate %91, %92 in 1 : vector<8x120xf32>, vector<8x8xf32> -> vector<8x128xf32>
    %c7 = arith.constant 7 : index
    %c0_28 = arith.constant 0 : index
    %94 = vector.load %arg1[%c7, %c0_28] : memref<9x128xf32, #tpu.memory_space<vmem>>, vector<1x128xf32>
    %95 = vector.broadcast %94 : vector<1x128xf32> to vector<8x128xf32>
    %96 = arith.mulf %93, %95 : vector<8x128xf32>
    %c0_29 = arith.constant 0 : index
    %c7_30 = arith.constant 7 : index
    %97 = vector.load %arg2[%c0_29, %c7_30] : memref<8x18xf32, #tpu.memory_space<vmem>>, vector<8x1xf32>
    %98 = vector.broadcast %97 : vector<8x1xf32> to vector<8x128xf32>
    %99 = arith.mulf %98, %96 : vector<8x128xf32>
    %100 = arith.addf %86, %99 : vector<8x128xf32>
    %c0_31 = arith.constant 0 : index
    %c16 = arith.constant 16 : index
    %101 = vector.load %arg2[%c0_31, %c16] : memref<8x18xf32, #tpu.memory_space<vmem>>, vector<8x1xf32>
    %102 = vector.broadcast %101 : vector<8x1xf32> to vector<8x128xf32>
    %103 = arith.mulf %102, %96 : vector<8x128xf32>
    %104 = arith.addf %90, %103 : vector<8x128xf32>
    %105 = vector.extract_strided_slice %0 {offsets = [0, 9], sizes = [8, 119], strides = [1, 1]} : vector<8x128xf32> to vector<8x119xf32>
    %106 = vector.extract_strided_slice %0 {offsets = [0, 0], sizes = [8, 9], strides = [1, 1]} : vector<8x128xf32> to vector<8x9xf32>
    %107 = tpu.concatenate %105, %106 in 1 : vector<8x119xf32>, vector<8x9xf32> -> vector<8x128xf32>
    %c8 = arith.constant 8 : index
    %c0_32 = arith.constant 0 : index
    %108 = vector.load %arg1[%c8, %c0_32] : memref<9x128xf32, #tpu.memory_space<vmem>>, vector<1x128xf32>
    %109 = vector.broadcast %108 : vector<1x128xf32> to vector<8x128xf32>
    %110 = arith.mulf %107, %109 : vector<8x128xf32>
    %c0_33 = arith.constant 0 : index
    %c8_34 = arith.constant 8 : index
    %111 = vector.load %arg2[%c0_33, %c8_34] : memref<8x18xf32, #tpu.memory_space<vmem>>, vector<8x1xf32>
    %112 = vector.broadcast %111 : vector<8x1xf32> to vector<8x128xf32>
    %113 = arith.mulf %112, %110 : vector<8x128xf32>
    %114 = arith.addf %100, %113 : vector<8x128xf32>
    %c0_35 = arith.constant 0 : index
    %c17 = arith.constant 17 : index
    %115 = vector.load %arg2[%c0_35, %c17] : memref<8x18xf32, #tpu.memory_space<vmem>>, vector<8x1xf32>
    %116 = vector.broadcast %115 : vector<8x1xf32> to vector<8x128xf32>
    %117 = arith.mulf %116, %110 : vector<8x128xf32>
    %118 = arith.addf %104, %117 : vector<8x128xf32>
    %119 = tpu.concatenate %114, %118 in 0 : vector<8x128xf32>, vector<8x128xf32> -> vector<16x128xf32>
    %c0_36 = arith.constant 0 : index
    %c0_37 = arith.constant 0 : index
    %120 = vector.load %arg3[%c0_36, %c0_37] : memref<8x16xf32, #tpu.memory_space<vmem>>, vector<8x16xf32>
    %cst = arith.constant dense<0.000000e+00> : vector<8x128xf32>
    %121 = tpu.matmul %120, %119, %cst {dimension_numbers = #tpu.dot_dimension_numbers<[1], [0], [0], [1], [0, 0, 1, 1], [], []>} : vector<8x16xf32>, vector<16x128xf32>, vector<8x128xf32> -> vector<8x128xf32>
    %c0_38 = arith.constant 0 : index
    %c0_39 = arith.constant 0 : index
    %122 = vector.load %arg4[%c0_38, %c0_39] : memref<8x128xf32, #tpu.memory_space<vmem>>, vector<8x128xf32>
    %123 = arith.addf %121, %122 : vector<8x128xf32>
    %c0_40 = arith.constant 0 : index
    %c0_41 = arith.constant 0 : index
    %124 = vector.load %arg5[%c0_40, %c0_41] : memref<8x128xf32, #tpu.memory_space<vmem>>, vector<8x128xf32>
    tpu.vector_store %arg5[%c0_40, %c0_41], %123 {strides = array<i32>} : memref<8x128xf32, #tpu.memory_space<vmem>>, vector<8x128xf32>,
    return
  }
}

module attributes {stable_mosaic.version = 11 : i64} {
  func.func @kernel(%arg0: memref<8x128xf32, #tpu.memory_space<vmem>>, %arg1: memref<8x128xf32, #tpu.memory_space<vmem>>, %arg2: memref<16x16xf32, #tpu.memory_space<vmem>>, %arg3: memref<16x1xf32, #tpu.memory_space<vmem>>, %arg4: memref<9x128xf32, #tpu.memory_space<vmem>>, %arg5: memref<16x18xf32, #tpu.memory_space<vmem>>, %arg6: memref<16x32xf32, #tpu.memory_space<vmem>>, %arg7: memref<16x128xf32, #tpu.memory_space<vmem>>) attributes {dimension_semantics = [], scalar_prefetch = 0 : i64, scratch_operands = 0 : i64, tpu.core_type = #tpu.core_type<tc>} {
    %c0 = arith.constant 0 : index
    %c0_0 = arith.constant 0 : index
    %0 = vector.load %arg0[%c0, %c0_0] : memref<8x128xf32, #tpu.memory_space<vmem>>, vector<8x128xf32>
    %c0_1 = arith.constant 0 : index
    %c0_2 = arith.constant 0 : index
    %1 = vector.load %arg1[%c0_1, %c0_2] : memref<8x128xf32, #tpu.memory_space<vmem>>, vector<8x128xf32>
    %2 = tpu.concatenate %0, %1 in 0 : vector<8x128xf32>, vector<8x128xf32> -> vector<16x128xf32>
    %c0_3 = arith.constant 0 : index
    %c0_4 = arith.constant 0 : index
    %3 = vector.load %arg2[%c0_3, %c0_4] : memref<16x16xf32, #tpu.memory_space<vmem>>, vector<16x16xf32>
    %cst = arith.constant dense<0.000000e+00> : vector<16x128xf32>
    %4 = tpu.matmul %3, %2, %cst {dimension_numbers = #tpu.dot_dimension_numbers<[1], [0], [0], [1], [0, 0, 1, 1], [], []>} : vector<16x16xf32>, vector<16x128xf32>, vector<16x128xf32> -> vector<16x128xf32>
    %c0_5 = arith.constant 0 : index
    %c0_6 = arith.constant 0 : index
    %5 = vector.load %arg3[%c0_5, %c0_6] : memref<16x1xf32, #tpu.memory_space<vmem>>, vector<16x1xf32>
    %6 = vector.broadcast %5 : vector<16x1xf32> to vector<16x128xf32>
    %7 = arith.addf %4, %6 : vector<16x128xf32>
    %cst_7 = arith.constant 0.000000e+00 : f32
    %8 = vector.broadcast %cst_7 : f32 to vector<16x128xf32>
    %9 = arith.subf %8, %7 : vector<16x128xf32>
    %10 = math.exp %9 : vector<16x128xf32>
    %cst_8 = arith.constant 1.000000e+00 : f32
    %11 = vector.broadcast %cst_8 : f32 to vector<16x128xf32>
    %12 = arith.addf %11, %10 : vector<16x128xf32>
    %13 = arith.divf %7, %12 : vector<16x128xf32>
    %c0_9 = arith.constant 0 : index
    %c4 = arith.constant 4 : index
    %14 = vector.load %arg5[%c0_9, %c4] : memref<16x18xf32, #tpu.memory_space<vmem>>, vector<16x1xf32>
    %15 = vector.broadcast %14 : vector<16x1xf32> to vector<16x128xf32>
    %16 = arith.mulf %15, %13 : vector<16x128xf32>
    %c0_10 = arith.constant 0 : index
    %c13 = arith.constant 13 : index
    %17 = vector.load %arg5[%c0_10, %c13] : memref<16x18xf32, #tpu.memory_space<vmem>>, vector<16x1xf32>
    %18 = vector.broadcast %17 : vector<16x1xf32> to vector<16x128xf32>
    %19 = arith.mulf %18, %13 : vector<16x128xf32>
    %20 = vector.extract_strided_slice %13 {offsets = [0, 119], sizes = [16, 9], strides = [1, 1]} : vector<16x128xf32> to vector<16x9xf32>
    %21 = vector.extract_strided_slice %13 {offsets = [0, 0], sizes = [16, 119], strides = [1, 1]} : vector<16x128xf32> to vector<16x119xf32>
    %22 = tpu.concatenate %20, %21 in 1 : vector<16x9xf32>, vector<16x119xf32> -> vector<16x128xf32>
    %c0_11 = arith.constant 0 : index
    %c0_12 = arith.constant 0 : index
    %23 = vector.load %arg4[%c0_11, %c0_12] : memref<9x128xf32, #tpu.memory_space<vmem>>, vector<1x128xf32>
    %24 = vector.broadcast %23 : vector<1x128xf32> to vector<16x128xf32>
    %25 = arith.mulf %22, %24 : vector<16x128xf32>
    %c0_13 = arith.constant 0 : index
    %c0_14 = arith.constant 0 : index
    %26 = vector.load %arg5[%c0_13, %c0_14] : memref<16x18xf32, #tpu.memory_space<vmem>>, vector<16x1xf32>
    %27 = vector.broadcast %26 : vector<16x1xf32> to vector<16x128xf32>
    %28 = arith.mulf %27, %25 : vector<16x128xf32>
    %29 = arith.addf %16, %28 : vector<16x128xf32>
    %c0_15 = arith.constant 0 : index
    %c9 = arith.constant 9 : index
    %30 = vector.load %arg5[%c0_15, %c9] : memref<16x18xf32, #tpu.memory_space<vmem>>, vector<16x1xf32>
    %31 = vector.broadcast %30 : vector<16x1xf32> to vector<16x128xf32>
    %32 = arith.mulf %31, %25 : vector<16x128xf32>
    %33 = arith.addf %19, %32 : vector<16x128xf32>
    %34 = vector.extract_strided_slice %13 {offsets = [0, 120], sizes = [16, 8], strides = [1, 1]} : vector<16x128xf32> to vector<16x8xf32>
    %35 = vector.extract_strided_slice %13 {offsets = [0, 0], sizes = [16, 120], strides = [1, 1]} : vector<16x128xf32> to vector<16x120xf32>
    %36 = tpu.concatenate %34, %35 in 1 : vector<16x8xf32>, vector<16x120xf32> -> vector<16x128xf32>
    %c1 = arith.constant 1 : index
    %c0_16 = arith.constant 0 : index
    %37 = vector.load %arg4[%c1, %c0_16] : memref<9x128xf32, #tpu.memory_space<vmem>>, vector<1x128xf32>
    %38 = vector.broadcast %37 : vector<1x128xf32> to vector<16x128xf32>
    %39 = arith.mulf %36, %38 : vector<16x128xf32>
    %c0_17 = arith.constant 0 : index
    %c1_18 = arith.constant 1 : index
    %40 = vector.load %arg5[%c0_17, %c1_18] : memref<16x18xf32, #tpu.memory_space<vmem>>, vector<16x1xf32>
    %41 = vector.broadcast %40 : vector<16x1xf32> to vector<16x128xf32>
    %42 = arith.mulf %41, %39 : vector<16x128xf32>
    %43 = arith.addf %29, %42 : vector<16x128xf32>
    %c0_19 = arith.constant 0 : index
    %c10 = arith.constant 10 : index
    %44 = vector.load %arg5[%c0_19, %c10] : memref<16x18xf32, #tpu.memory_space<vmem>>, vector<16x1xf32>
    %45 = vector.broadcast %44 : vector<16x1xf32> to vector<16x128xf32>
    %46 = arith.mulf %45, %39 : vector<16x128xf32>
    %47 = arith.addf %33, %46 : vector<16x128xf32>
    %48 = vector.extract_strided_slice %13 {offsets = [0, 121], sizes = [16, 7], strides = [1, 1]} : vector<16x128xf32> to vector<16x7xf32>
    %49 = vector.extract_strided_slice %13 {offsets = [0, 0], sizes = [16, 121], strides = [1, 1]} : vector<16x128xf32> to vector<16x121xf32>
    %50 = tpu.concatenate %48, %49 in 1 : vector<16x7xf32>, vector<16x121xf32> -> vector<16x128xf32>
    %c2 = arith.constant 2 : index
    %c0_20 = arith.constant 0 : index
    %51 = vector.load %arg4[%c2, %c0_20] : memref<9x128xf32, #tpu.memory_space<vmem>>, vector<1x128xf32>
    %52 = vector.broadcast %51 : vector<1x128xf32> to vector<16x128xf32>
    %53 = arith.mulf %50, %52 : vector<16x128xf32>
    %c0_21 = arith.constant 0 : index
    %c2_22 = arith.constant 2 : index
    %54 = vector.load %arg5[%c0_21, %c2_22] : memref<16x18xf32, #tpu.memory_space<vmem>>, vector<16x1xf32>
    %55 = vector.broadcast %54 : vector<16x1xf32> to vector<16x128xf32>
    %56 = arith.mulf %55, %53 : vector<16x128xf32>
    %57 = arith.addf %43, %56 : vector<16x128xf32>
    %c0_23 = arith.constant 0 : index
    %c11 = arith.constant 11 : index
    %58 = vector.load %arg5[%c0_23, %c11] : memref<16x18xf32, #tpu.memory_space<vmem>>, vector<16x1xf32>
    %59 = vector.broadcast %58 : vector<16x1xf32> to vector<16x128xf32>
    %60 = arith.mulf %59, %53 : vector<16x128xf32>
    %61 = arith.addf %47, %60 : vector<16x128xf32>
    %62 = vector.extract_strided_slice %13 {offsets = [0, 127], sizes = [16, 1], strides = [1, 1]} : vector<16x128xf32> to vector<16x1xf32>
    %63 = vector.extract_strided_slice %13 {offsets = [0, 0], sizes = [16, 127], strides = [1, 1]} : vector<16x128xf32> to vector<16x127xf32>
    %64 = tpu.concatenate %62, %63 in 1 : vector<16x1xf32>, vector<16x127xf32> -> vector<16x128xf32>
    %c3 = arith.constant 3 : index
    %c0_24 = arith.constant 0 : index
    %65 = vector.load %arg4[%c3, %c0_24] : memref<9x128xf32, #tpu.memory_space<vmem>>, vector<1x128xf32>
    %66 = vector.broadcast %65 : vector<1x128xf32> to vector<16x128xf32>
    %67 = arith.mulf %64, %66 : vector<16x128xf32>
    %c0_25 = arith.constant 0 : index
    %c3_26 = arith.constant 3 : index
    %68 = vector.load %arg5[%c0_25, %c3_26] : memref<16x18xf32, #tpu.memory_space<vmem>>, vector<16x1xf32>
    %69 = vector.broadcast %68 : vector<16x1xf32> to vector<16x128xf32>
    %70 = arith.mulf %69, %67 : vector<16x128xf32>
    %71 = arith.addf %57, %70 : vector<16x128xf32>
    %c0_27 = arith.constant 0 : index
    %c12 = arith.constant 12 : index
    %72 = vector.load %arg5[%c0_27, %c12] : memref<16x18xf32, #tpu.memory_space<vmem>>, vector<16x1xf32>
    %73 = vector.broadcast %72 : vector<16x1xf32> to vector<16x128xf32>
    %74 = arith.mulf %73, %67 : vector<16x128xf32>
    %75 = arith.addf %61, %74 : vector<16x128xf32>
    %76 = vector.extract_strided_slice %13 {offsets = [0, 1], sizes = [16, 127], strides = [1, 1]} : vector<16x128xf32> to vector<16x127xf32>
    %77 = vector.extract_strided_slice %13 {offsets = [0, 0], sizes = [16, 1], strides = [1, 1]} : vector<16x128xf32> to vector<16x1xf32>
    %78 = tpu.concatenate %76, %77 in 1 : vector<16x127xf32>, vector<16x1xf32> -> vector<16x128xf32>
    %c5 = arith.constant 5 : index
    %c0_28 = arith.constant 0 : index
    %79 = vector.load %arg4[%c5, %c0_28] : memref<9x128xf32, #tpu.memory_space<vmem>>, vector<1x128xf32>
    %80 = vector.broadcast %79 : vector<1x128xf32> to vector<16x128xf32>
    %81 = arith.mulf %78, %80 : vector<16x128xf32>
    %c0_29 = arith.constant 0 : index
    %c5_30 = arith.constant 5 : index
    %82 = vector.load %arg5[%c0_29, %c5_30] : memref<16x18xf32, #tpu.memory_space<vmem>>, vector<16x1xf32>
    %83 = vector.broadcast %82 : vector<16x1xf32> to vector<16x128xf32>
    %84 = arith.mulf %83, %81 : vector<16x128xf32>
    %85 = arith.addf %71, %84 : vector<16x128xf32>
    %c0_31 = arith.constant 0 : index
    %c14 = arith.constant 14 : index
    %86 = vector.load %arg5[%c0_31, %c14] : memref<16x18xf32, #tpu.memory_space<vmem>>, vector<16x1xf32>
    %87 = vector.broadcast %86 : vector<16x1xf32> to vector<16x128xf32>
    %88 = arith.mulf %87, %81 : vector<16x128xf32>
    %89 = arith.addf %75, %88 : vector<16x128xf32>
    %90 = vector.extract_strided_slice %13 {offsets = [0, 7], sizes = [16, 121], strides = [1, 1]} : vector<16x128xf32> to vector<16x121xf32>
    %91 = vector.extract_strided_slice %13 {offsets = [0, 0], sizes = [16, 7], strides = [1, 1]} : vector<16x128xf32> to vector<16x7xf32>
    %92 = tpu.concatenate %90, %91 in 1 : vector<16x121xf32>, vector<16x7xf32> -> vector<16x128xf32>
    %c6 = arith.constant 6 : index
    %c0_32 = arith.constant 0 : index
    %93 = vector.load %arg4[%c6, %c0_32] : memref<9x128xf32, #tpu.memory_space<vmem>>, vector<1x128xf32>
    %94 = vector.broadcast %93 : vector<1x128xf32> to vector<16x128xf32>
    %95 = arith.mulf %92, %94 : vector<16x128xf32>
    %c0_33 = arith.constant 0 : index
    %c6_34 = arith.constant 6 : index
    %96 = vector.load %arg5[%c0_33, %c6_34] : memref<16x18xf32, #tpu.memory_space<vmem>>, vector<16x1xf32>
    %97 = vector.broadcast %96 : vector<16x1xf32> to vector<16x128xf32>
    %98 = arith.mulf %97, %95 : vector<16x128xf32>
    %99 = arith.addf %85, %98 : vector<16x128xf32>
    %c0_35 = arith.constant 0 : index
    %c15 = arith.constant 15 : index
    %100 = vector.load %arg5[%c0_35, %c15] : memref<16x18xf32, #tpu.memory_space<vmem>>, vector<16x1xf32>
    %101 = vector.broadcast %100 : vector<16x1xf32> to vector<16x128xf32>
    %102 = arith.mulf %101, %95 : vector<16x128xf32>
    %103 = arith.addf %89, %102 : vector<16x128xf32>
    %104 = vector.extract_strided_slice %13 {offsets = [0, 8], sizes = [16, 120], strides = [1, 1]} : vector<16x128xf32> to vector<16x120xf32>
    %105 = vector.extract_strided_slice %13 {offsets = [0, 0], sizes = [16, 8], strides = [1, 1]} : vector<16x128xf32> to vector<16x8xf32>
    %106 = tpu.concatenate %104, %105 in 1 : vector<16x120xf32>, vector<16x8xf32> -> vector<16x128xf32>
    %c7 = arith.constant 7 : index
    %c0_36 = arith.constant 0 : index
    %107 = vector.load %arg4[%c7, %c0_36] : memref<9x128xf32, #tpu.memory_space<vmem>>, vector<1x128xf32>
    %108 = vector.broadcast %107 : vector<1x128xf32> to vector<16x128xf32>
    %109 = arith.mulf %106, %108 : vector<16x128xf32>
    %c0_37 = arith.constant 0 : index
    %c7_38 = arith.constant 7 : index
    %110 = vector.load %arg5[%c0_37, %c7_38] : memref<16x18xf32, #tpu.memory_space<vmem>>, vector<16x1xf32>
    %111 = vector.broadcast %110 : vector<16x1xf32> to vector<16x128xf32>
    %112 = arith.mulf %111, %109 : vector<16x128xf32>
    %113 = arith.addf %99, %112 : vector<16x128xf32>
    %c0_39 = arith.constant 0 : index
    %c16 = arith.constant 16 : index
    %114 = vector.load %arg5[%c0_39, %c16] : memref<16x18xf32, #tpu.memory_space<vmem>>, vector<16x1xf32>
    %115 = vector.broadcast %114 : vector<16x1xf32> to vector<16x128xf32>
    %116 = arith.mulf %115, %109 : vector<16x128xf32>
    %117 = arith.addf %103, %116 : vector<16x128xf32>
    %118 = vector.extract_strided_slice %13 {offsets = [0, 9], sizes = [16, 119], strides = [1, 1]} : vector<16x128xf32> to vector<16x119xf32>
    %119 = vector.extract_strided_slice %13 {offsets = [0, 0], sizes = [16, 9], strides = [1, 1]} : vector<16x128xf32> to vector<16x9xf32>
    %120 = tpu.concatenate %118, %119 in 1 : vector<16x119xf32>, vector<16x9xf32> -> vector<16x128xf32>
    %c8 = arith.constant 8 : index
    %c0_40 = arith.constant 0 : index
    %121 = vector.load %arg4[%c8, %c0_40] : memref<9x128xf32, #tpu.memory_space<vmem>>, vector<1x128xf32>
    %122 = vector.broadcast %121 : vector<1x128xf32> to vector<16x128xf32>
    %123 = arith.mulf %120, %122 : vector<16x128xf32>
    %c0_41 = arith.constant 0 : index
    %c8_42 = arith.constant 8 : index
    %124 = vector.load %arg5[%c0_41, %c8_42] : memref<16x18xf32, #tpu.memory_space<vmem>>, vector<16x1xf32>
    %125 = vector.broadcast %124 : vector<16x1xf32> to vector<16x128xf32>
    %126 = arith.mulf %125, %123 : vector<16x128xf32>
    %127 = arith.addf %113, %126 : vector<16x128xf32>
    %c0_43 = arith.constant 0 : index
    %c17 = arith.constant 17 : index
    %128 = vector.load %arg5[%c0_43, %c17] : memref<16x18xf32, #tpu.memory_space<vmem>>, vector<16x1xf32>
    %129 = vector.broadcast %128 : vector<16x1xf32> to vector<16x128xf32>
    %130 = arith.mulf %129, %123 : vector<16x128xf32>
    %131 = arith.addf %117, %130 : vector<16x128xf32>
    %132 = tpu.concatenate %127, %131 in 0 : vector<16x128xf32>, vector<16x128xf32> -> vector<32x128xf32>
    %c0_44 = arith.constant 0 : index
    %c0_45 = arith.constant 0 : index
    %133 = vector.load %arg6[%c0_44, %c0_45] : memref<16x32xf32, #tpu.memory_space<vmem>>, vector<16x32xf32>
    %cst_46 = arith.constant dense<0.000000e+00> : vector<16x128xf32>
    %134 = tpu.matmul %133, %132, %cst_46 {dimension_numbers = #tpu.dot_dimension_numbers<[1], [0], [0], [1], [0, 0, 1, 1], [], []>} : vector<16x32xf32>, vector<32x128xf32>, vector<16x128xf32> -> vector<16x128xf32>
    %c0_47 = arith.constant 0 : index
    %c0_48 = arith.constant 0 : index
    %135 = vector.load %arg7[%c0_47, %c0_48] : memref<16x128xf32, #tpu.memory_space<vmem>>, vector<16x128xf32>
    tpu.vector_store %arg7[%c0_47, %c0_48], %134 {strides = array<i32>} : memref<16x128xf32, #tpu.memory_space<vmem>>, vector<16x128xf32>,
    return
  }
}

</mosaic_0001>

<llo_original>
// kernel: tpu_custom_call.1
$region0: #{tpu_custom_call.1}
  #allocation0 [shape = 'u32[]', space=smem, size = 0x4, offset = 0x4, fixed_abs, tag = 'smem constant byte address 0x4 - core index']
  #allocation1 [shape = 'u32[144,128]{1,0:T(1,128)}', space=vmem, size = 0x12000, scoped, tag = 'internal scratch']
  %s0 = inlined_call_operand.hbm [shape: f32[8,128], index: 0, kind: input, shape index: {}]
  %s1 = inlined_call_operand.hbm [shape: f32[8,128], index: 1, kind: output, shape index: {}]
  %s2 = sld [smem:[#allocation0]]
  $region18: #{tpu_custom_call.1} parent=0
    _
  %s4 = ssub.s32 1, %s2
  %s5 = scalar_select 0, %s4, %s2
  $region1: #{tpu_custom_call.1} parent=0
    #allocation2 [shape = 'u8[4096]{0}', space=vmem, size = 0x1000, scoped, tag = 'input window, operand 0, single buffered']
    #allocation3 [shape = 's32[1]{0}', space=sflag, size = 0x4, scoped, tag = 'scoped memory for tpu_custom_call.1']
    #allocation4 [shape = 's32[1]{0}', space=sflag, size = 0x4, scoped, tag = 'scoped memory for tpu_custom_call.1']
    #allocation5 [shape = 'u8[4096]{0}', space=vmem, size = 0x1000, scoped, tag = 'output window, operand 0, single buffered']
    %6 = vsyncpa [#allocation3], 0
    %7 = vsyncpa [#allocation4], 0
    // Predicated region
    $region2: #{tpu_custom_call.1} parent=1 // pred_check
      _
    $region3: #{tpu_custom_call.1} parent=1 // pred_check_branch
      %9 = sbr.rel (0) target = $region5
    $region4: #{tpu_custom_call.1} parent=1 // pred_region
      %s11 = ssub.s32 128, 128
      %12 = vsyncadd [#allocation3], %s11
      %s14 = sshll.u32 [#allocation2], 4
      %s15 = int_to_ptr.vmem [resolvable:$true] %s14
      %17 = dma.hbm_to_vmem [thread:$0]  %s0, 128, %s15, [#allocation3]
    $region5: #{tpu_custom_call.1} parent=1 // pred_fallthru
      _
    // Predicated region
    $region6: #{tpu_custom_call.1} parent=1 // pred_check
      _
    $region7: #{tpu_custom_call.1} parent=1 // pred_check_branch
      %19 = sbr.rel (0) target = $region9
    $region8: #{tpu_custom_call.1} parent=1 // pred_region
      %20 = dma.done [#allocation3], 128
    $region9: #{tpu_custom_call.1} parent=1 // pred_fallthru
      _
    %v21 = vld [vmem:[#allocation2] sm:$0xff]
    %22 = vrot.lane.b32.xlu0 %v21, 3
    %v23 = vpop.permute.xlu0 %22
    %24 = vst [vmem:[#allocation5] sm:$0xff] %v23
    // Predicated region
    $region10: #{tpu_custom_call.1} parent=1 // pred_check
      _
    $region11: #{tpu_custom_call.1} parent=1 // pred_check_branch
      %26 = sbr.rel (0) target = $region13
    $region12: #{tpu_custom_call.1} parent=1 // pred_region
      %s28 = ssub.s32 128, 128
      %29 = vsyncadd [#allocation4], %s28
      %s31 = sshll.u32 [#allocation5], 4
      %s32 = int_to_ptr.vmem [resolvable:$true] %s31
      %34 = dma.vmem_to_hbm [thread:$0]  %s32, 128, %s1, [#allocation4]
    $region13: #{tpu_custom_call.1} parent=1 // pred_fallthru
      _
    // Predicated region
    $region14: #{tpu_custom_call.1} parent=1 // pred_check
      _
    $region15: #{tpu_custom_call.1} parent=1 // pred_check_branch
      %36 = sbr.rel (0) target = $region17
    $region16: #{tpu_custom_call.1} parent=1 // pred_region
      %37 = dma.done [#allocation4], 128
    $region17: #{tpu_custom_call.1} parent=1 // pred_fallthru
      _
    %38 = vsyncpa [#allocation3], 1
    %39 = vsyncpa [#allocation4], 1

// kernel: tpu_custom_call.1
$region0: #{tpu_custom_call.1}
  #allocation0 [shape = 'u32[]', space=smem, size = 0x4, offset = 0x4, fixed_abs, tag = 'smem constant byte address 0x4 - core index']
  #allocation1 [shape = 'u32[144,128]{1,0:T(1,128)}', space=vmem, size = 0x12000, scoped, tag = 'internal scratch']
  %s0 = inlined_call_operand.hbm [shape: f32[8,128], index: 0, kind: input, shape index: {}]
  %s1 = inlined_call_operand.hbm [shape: f32[8,128], index: 1, kind: output, shape index: {}]
  %s2 = sld [smem:[#allocation0]]
  $region18: #{tpu_custom_call.1} parent=0
    _
  %s4 = ssub.s32 1, %s2
  %s5 = scalar_select 0, %s4, %s2
  $region1: #{tpu_custom_call.1} parent=0
    #allocation2 [shape = 'u8[4096]{0}', space=vmem, size = 0x1000, scoped, tag = 'input window, operand 0, single buffered']
    #allocation3 [shape = 's32[1]{0}', space=sflag, size = 0x4, scoped, tag = 'scoped memory for tpu_custom_call.1']
    #allocation4 [shape = 's32[1]{0}', space=sflag, size = 0x4, scoped, tag = 'scoped memory for tpu_custom_call.1']
    #allocation5 [shape = 'u8[4096]{0}', space=vmem, size = 0x1000, scoped, tag = 'output window, operand 0, single buffered']
    %6 = vsyncpa [#allocation3], 0
    %7 = vsyncpa [#allocation4], 0
    // Predicated region
    $region2: #{tpu_custom_call.1} parent=1 // pred_check
      _
    $region3: #{tpu_custom_call.1} parent=1 // pred_check_branch
      %9 = sbr.rel (0) target = $region5
    $region4: #{tpu_custom_call.1} parent=1 // pred_region
      %s11 = ssub.s32 128, 128
      %12 = vsyncadd [#allocation3], %s11
      %s14 = sshll.u32 [#allocation2], 4
      %s15 = int_to_ptr.vmem [resolvable:$true] %s14
      %17 = dma.hbm_to_vmem [thread:$0]  %s0, 128, %s15, [#allocation3]
    $region5: #{tpu_custom_call.1} parent=1 // pred_fallthru
      _
    // Predicated region
    $region6: #{tpu_custom_call.1} parent=1 // pred_check
      _
    $region7: #{tpu_custom_call.1} parent=1 // pred_check_branch
      %19 = sbr.rel (0) target = $region9
    $region8: #{tpu_custom_call.1} parent=1 // pred_region
      %20 = dma.done [#allocation3], 128
    $region9: #{tpu_custom_call.1} parent=1 // pred_fallthru
      _
    %v21 = vld [vmem:[#allocation2] sm:$0xff]
    %v22 = vadd.f32 %v21, 2.0
    %v23 = vrcp.pop %v22
    %24 = vst [vmem:[#allocation5] sm:$0xff] %v23
    // Predicated region
    $region10: #{tpu_custom_call.1} parent=1 // pred_check
      _
    $region11: #{tpu_custom_call.1} parent=1 // pred_check_branch
      %26 = sbr.rel (0) target = $region13
    $region12: #{tpu_custom_call.1} parent=1 // pred_region
      %s28 = ssub.s32 128, 128
      %29 = vsyncadd [#allocation4], %s28
      %s31 = sshll.u32 [#allocation5], 4
      %s32 = int_to_ptr.vmem [resolvable:$true] %s31
      %34 = dma.vmem_to_hbm [thread:$0]  %s32, 128, %s1, [#allocation4]
    $region13: #{tpu_custom_call.1} parent=1 // pred_fallthru
      _
    // Predicated region
    $region14: #{tpu_custom_call.1} parent=1 // pred_check
      _
    $region15: #{tpu_custom_call.1} parent=1 // pred_check_branch
      %36 = sbr.rel (0) target = $region17
    $region16: #{tpu_custom_call.1} parent=1 // pred_region
      %37 = dma.done [#allocation4], 128
    $region17: #{tpu_custom_call.1} parent=1 // pred_fallthru
      _
    %38 = vsyncpa [#allocation3], 1
    %39 = vsyncpa [#allocation4], 1

// kernel: csp_bottleneck_forward.5
$region0: #{csp_bottleneck_forward.5}
  #allocation0 [shape = 'u32[]', space=smem, size = 0x4, offset = 0x4, fixed_abs, tag = 'smem constant byte address 0x4 - core index']
  #allocation1 [shape = 'u32[144,128]{1,0:T(1,128)}', space=vmem, size = 0x12000, scoped, tag = 'internal scratch']
  %s0 = inlined_call_operand.vmem [shape: f32[8,128], index: 0, kind: input, shape index: {}]
  %s1 = inlined_call_operand.vmem [shape: f32[8,128], index: 1, kind: input, shape index: {}]
  %s2 = inlined_call_operand.vmem [shape: f32[8,128], index: 2, kind: input, shape index: {}]
  %s3 = inlined_call_operand.vmem [shape: f32[8,128], index: 3, kind: input, shape index: {}]
  %s4 = inlined_call_operand.vmem [shape: f32[1,128], index: 4, kind: input, shape index: {}]
  %s5 = inlined_call_operand.vmem [shape: f32[1,128], index: 5, kind: input, shape index: {}]
  %s6 = inlined_call_operand.vmem [shape: f32[8,72], index: 6, kind: input, shape index: {}]
  %s7 = inlined_call_operand.vmem [shape: f32[8,1], index: 7, kind: input, shape index: {}]
  %s8 = inlined_call_operand.vmem [shape: f32[8,128], index: 8, kind: output, shape index: {}]
  %s9 = sld [smem:[#allocation0]]
  $region42: #{csp_bottleneck_forward.5} parent=0
    _
  %s11 = ssub.s32 1, %s9
  %s12 = scalar_select 0, %s11, %s9
  // Predicated region
  $region2: #{csp_bottleneck_forward.5} parent=0 // pred_check
    _
  $region3: #{csp_bottleneck_forward.5} parent=0 // pred_check_branch
    %14 = sbr.rel (0) target = $region5
  $region4: #{csp_bottleneck_forward.5} parent=0 // pred_region
    _
  $region5: #{csp_bottleneck_forward.5} parent=0 // pred_fallthru
    _
  // Predicated region
  $region6: #{csp_bottleneck_forward.5} parent=0 // pred_check
    _
  $region7: #{csp_bottleneck_forward.5} parent=0 // pred_check_branch
    %16 = sbr.rel (0) target = $region9
  $region8: #{csp_bottleneck_forward.5} parent=0 // pred_region
    _
  $region9: #{csp_bottleneck_forward.5} parent=0 // pred_fallthru
    _
  // Predicated region
  $region10: #{csp_bottleneck_forward.5} parent=0 // pred_check
    _
  $region11: #{csp_bottleneck_forward.5} parent=0 // pred_check_branch
    %18 = sbr.rel (0) target = $region13
  $region12: #{csp_bottleneck_forward.5} parent=0 // pred_region
    _
  $region13: #{csp_bottleneck_forward.5} parent=0 // pred_fallthru
    _
  // Predicated region
  $region14: #{csp_bottleneck_forward.5} parent=0 // pred_check
    _
  $region15: #{csp_bottleneck_forward.5} parent=0 // pred_check_branch
    %20 = sbr.rel (0) target = $region17
  $region16: #{csp_bottleneck_forward.5} parent=0 // pred_region
    _
  $region17: #{csp_bottleneck_forward.5} parent=0 // pred_fallthru
    _
  // Predicated region
  $region18: #{csp_bottleneck_forward.5} parent=0 // pred_check
    _
  $region19: #{csp_bottleneck_forward.5} parent=0 // pred_check_branch
    %22 = sbr.rel (0) target = $region21
  $region20: #{csp_bottleneck_forward.5} parent=0 // pred_region
    _
  $region21: #{csp_bottleneck_forward.5} parent=0 // pred_fallthru
    _
  // Predicated region
  $region22: #{csp_bottleneck_forward.5} parent=0 // pred_check
    _
  $region23: #{csp_bottleneck_forward.5} parent=0 // pred_check_branch
    %24 = sbr.rel (0) target = $region25
  $region24: #{csp_bottleneck_forward.5} parent=0 // pred_region
    _
  $region25: #{csp_bottleneck_forward.5} parent=0 // pred_fallthru
    _
  // Predicated region
  $region26: #{csp_bottleneck_forward.5} parent=0 // pred_check
    _
  $region27: #{csp_bottleneck_forward.5} parent=0 // pred_check_branch
    %26 = sbr.rel (0) target = $region29
  $region28: #{csp_bottleneck_forward.5} parent=0 // pred_region
    _
  $region29: #{csp_bottleneck_forward.5} parent=0 // pred_fallthru
    _
  // Predicated region
  $region30: #{csp_bottleneck_forward.5} parent=0 // pred_check
    _
  $region31: #{csp_bottleneck_forward.5} parent=0 // pred_check_branch
    %28 = sbr.rel (0) target = $region33
  $region32: #{csp_bottleneck_forward.5} parent=0 // pred_region
    _
  $region33: #{csp_bottleneck_forward.5} parent=0 // pred_fallthru
    _
  %v29 = vld [vmem:[%s0] sm:$0xff]
  %v30 = vld [vmem:[%s1] sm:$0xff]
  %v31 = vld [vmem:[%s2] sm:$0xff]
  %v32 = vld [vmem:[%s3] sm:$0xff]
  %v33 = vld [vmem:[%s4] sm:$0x1]
  %v34 = vld [vmem:[%s5] sm:$0x1]
  %36 = vrot.lane.b32.xlu0 %v32, 9
  %v37 = vpop.permute.xlu0 %36
  %v40 = vlaneseq
  %v41 = vshrl.u32 %v40, 7
  %v42 = vsub.s32 0, %v41
  %v43 = vrot.slane %v33, %v42
  %v45 = vmul.f32 %v37, %v43
  %v47 = vlaneseq
  %v48 = vshrl.u32 %v47, 7
  %v49 = vsub.s32 0, %v48
  %v50 = vrot.slane %v34, %v49
  %v52 = vmul.f32 %v45, %v50
  %54 = vrot.lane.b32.xlu0 %v31, 8
  %v55 = vpop.permute.xlu0 %54
  %v57 = vmul.f32 %v55, %v43
  %58 = vrot.lane.b32.xlu0 %v32, 8
  %v59 = vpop.permute.xlu0 %58
  %v61 = vmul.f32 %v59, %v43
  %63 = vrot.lane.b32.xlu0 %v30, 1
  %v64 = vpop.permute.xlu0 %63
  %v66 = vmul.f32 %v64, %v50
  %67 = vrot.lane.b32.xlu0 %v32, 1
  %v68 = vpop.permute.xlu0 %67
  %v70 = vmul.f32 %v68, %v50
  %v71 = vld [vmem:[%s6] sm:$0xff]
  %v72 = vld [vmem:[%s7] sm:$0xff]
  %74 = vset.pattern.permute.xlu0 0
  %75 = vperm.xlu0 %74, %v72
  %v76 = vpop.permute.xlu0 %75
  %vm78 = vcmask 588800
  %v80 = vsel %vm78, %v71, 0
  %82 = vmatprep.subr.mxu0 0.0
  %83 = vmatpush1.msra.mxu0 %v52
  %84 = vmatprep.subr.mxu0 0.0
  %85 = vmatpush1.msra.mxu0 %v57
  %86 = vmatprep.subr.mxu0 0.0
  %87 = vmatpush1.msra.mxu0 %v61
  %88 = vmatprep.subr.mxu0 0.0
  %89 = vmatpush1.msra.mxu0 %v66
  %90 = vmatprep.subr.mxu0 0.0
  %91 = vmatpush1.msra.mxu0 %v29
  %92 = vmatprep.subr.mxu0 0.0
  %93 = vmatpush1.msra.mxu0 %v30
  %94 = vmatprep.subr.mxu0 0.0
  %95 = vmatpush1.msra.mxu0 %v70
  %96 = vmatprep.subr.mxu0 0.0
  %97 = vmatpush1.msra.mxu0 %v31
  %98 = vmatprep.subr.mxu0 0.0
  %99 = vmatpush1.msra.mxu0 %v32
  %100 = vmatprep.subr.mxu0 0.0
  %101 = vmatpush1.msra.mxu0 0.0
  %102 = vmatprep.subr.mxu0 0.0
  %103 = vmatpush1.msra.mxu0 0.0
  %104 = vmatprep.subr.mxu0 0.0
  %105 = vmatpush1.msra.mxu0 0.0
  %106 = vmatprep.subr.mxu0 0.0
  %107 = vmatpush1.msra.mxu0 0.0
  %108 = vmatprep.subr.mxu0 0.0
  %109 = vmatpush1.msra.mxu0 0.0
  %110 = vmatprep.subr.mxu0 0.0
  %111 = vmatpush1.msra.mxu0 0.0
  %112 = vmatprep.subr.mxu0 0.0
  %113 = vmatpush1.msra.mxu0 0.0
  %114 = vmatprep.subr.mxu0 0.0
  %115 = vmatpush1.msra.mxu0 0.0
  %116 = vmatprep.subr.mxu0 0.0
  %117 = vmatpush1.msra.mxu0 0.0
  %118 = vmatprep.subr.mxu0 0.0
  %119 = vmatpush1.msra.mxu0 0.0
  %120 = vmatprep.subr.mxu0 0.0
  %121 = vmatpush1.msra.mxu0 0.0
  %122 = vmatprep.subr.mxu0 0.0
  %123 = vmatpush1.msra.mxu0 0.0
  %124 = vmatprep.subr.mxu0 0.0
  %125 = vmatpush1.msra.mxu0 0.0
  %126 = vmatprep.subr.mxu0 0.0
  %127 = vmatpush1.msra.mxu0 0.0
  %128 = vmatprep.subr.mxu0 0.0
  %129 = vmatpush1.msra.mxu0 0.0
  %130 = vmatprep.subr.mxu0 0.0
  %131 = vmatpush1.msra.mxu0 0.0
  %132 = vmatprep.subr.mxu0 0.0
  %133 = vmatpush1.msra.mxu0 0.0
  %134 = vmatprep.subr.mxu0 0.0
  %135 = vmatpush1.msra.mxu0 0.0
  %136 = vmatprep.subr.mxu0 0.0
  %137 = vmatpush1.msra.mxu0 0.0
  %138 = vmatprep.subr.mxu0 0.0
  %139 = vmatpush1.msra.mxu0 0.0
  %140 = vmatprep.subr.mxu0 0.0
  %141 = vmatpush1.msra.mxu0 0.0
  %142 = vmatprep.subr.mxu0 0.0
  %143 = vmatpush1.msra.mxu0 0.0
  %144 = vmatprep.subr.mxu0 0.0
  %145 = vmatpush1.msra.mxu0 0.0
  %146 = vmatprep.mubr.f32.mxu0 0.0
  %147 = vmatmul.mubr.f32.gmra.mrb[0].mxu0 %v80
  %v148 = vpop.f32.mrb[0].mxu0
  %v149 = vadd.f32 %v76, %v148
  %v150 = vpop.f32.mrb[0].mxu0
  %151 = vdwg.mxu0
  %v152 = vsub.f32 0.0, %v149
  %v153 = vmul.f32 %v152, 1.442695
  %v154 = vpow.pop %v153
  %v155 = vadd.f32 %v154, 1.0
  %v156 = vrcp.pop %v155
  %v157 = vmul.f32 %v149, %v156
  %158 = vst [vmem:[%s8] sm:$0xff] %v157
  // Predicated region
  $region34: #{csp_bottleneck_forward.5} parent=0 // pred_check
    _
  $region35: #{csp_bottleneck_forward.5} parent=0 // pred_check_branch
    %160 = sbr.rel (0) target = $region37
  $region36: #{csp_bottleneck_forward.5} parent=0 // pred_region
    _
  $region37: #{csp_bottleneck_forward.5} parent=0 // pred_fallthru
    _
  // Predicated region
  $region38: #{csp_bottleneck_forward.5} parent=0 // pred_check
    _
  $region39: #{csp_bottleneck_forward.5} parent=0 // pred_check_branch
    %162 = sbr.rel (0) target = $region41
  $region40: #{csp_bottleneck_forward.5} parent=0 // pred_region
    _
  $region41: #{csp_bottleneck_forward.5} parent=0 // pred_fallthru
    _

// kernel: csp_bottleneck_forward.6
$region0: #{csp_bottleneck_forward.6}
  #allocation0 [shape = 'u32[]', space=smem, size = 0x4, offset = 0x4, fixed_abs, tag = 'smem constant byte address 0x4 - core index']
  #allocation1 [shape = 'u32[144,128]{1,0:T(1,128)}', space=vmem, size = 0x12000, scoped, tag = 'internal scratch']
  %s0 = inlined_call_operand.vmem [shape: f32[8,128], index: 0, kind: input, shape index: {}]
  %s1 = inlined_call_operand.vmem [shape: f32[9,128], index: 1, kind: input, shape index: {}]
  %s2 = inlined_call_operand.vmem [shape: f32[8,18], index: 2, kind: input, shape index: {}]
  %s3 = inlined_call_operand.vmem [shape: f32[8,16], index: 3, kind: input, shape index: {}]
  %s4 = inlined_call_operand.vmem [shape: f32[8,128], index: 4, kind: output, shape index: {}]
  %s5 = sld [smem:[#allocation0]]
  $region26: #{csp_bottleneck_forward.6} parent=0
    _
  %s7 = ssub.s32 1, %s5
  %s8 = scalar_select 0, %s7, %s5
  // Predicated region
  $region2: #{csp_bottleneck_forward.6} parent=0 // pred_check
    _
  $region3: #{csp_bottleneck_forward.6} parent=0 // pred_check_branch
    %10 = sbr.rel (0) target = $region5
  $region4: #{csp_bottleneck_forward.6} parent=0 // pred_region
    _
  $region5: #{csp_bottleneck_forward.6} parent=0 // pred_fallthru
    _
  // Predicated region
  $region6: #{csp_bottleneck_forward.6} parent=0 // pred_check
    _
  $region7: #{csp_bottleneck_forward.6} parent=0 // pred_check_branch
    %12 = sbr.rel (0) target = $region9
  $region8: #{csp_bottleneck_forward.6} parent=0 // pred_region
    _
  $region9: #{csp_bottleneck_forward.6} parent=0 // pred_fallthru
    _
  // Predicated region
  $region10: #{csp_bottleneck_forward.6} parent=0 // pred_check
    _
  $region11: #{csp_bottleneck_forward.6} parent=0 // pred_check_branch
    %14 = sbr.rel (0) target = $region13
  $region12: #{csp_bottleneck_forward.6} parent=0 // pred_region
    _
  $region13: #{csp_bottleneck_forward.6} parent=0 // pred_fallthru
    _
  // Predicated region
  $region14: #{csp_bottleneck_forward.6} parent=0 // pred_check
    _
  $region15: #{csp_bottleneck_forward.6} parent=0 // pred_check_branch
    %16 = sbr.rel (0) target = $region17
  $region16: #{csp_bottleneck_forward.6} parent=0 // pred_region
    _
  $region17: #{csp_bottleneck_forward.6} parent=0 // pred_fallthru
    _
  %v17 = vld [vmem:[%s0] sm:$0xff]
  %v18 = vld [vmem:[%s2] sm:$0xff]
  %20 = vset.pattern.permute.xlu0 4
  %21 = vperm.xlu0 %20, %v18
  %v22 = vpop.permute.xlu0 %21
  %v24 = vmul.f32 %v22, %v17
  %25 = vset.pattern.permute.xlu0 13
  %26 = vperm.xlu0 %25, %v18
  %v27 = vpop.permute.xlu0 %26
  %v29 = vmul.f32 %v27, %v17
  %31 = vrot.lane.b32.xlu0 %v17, 9
  %v32 = vpop.permute.xlu0 %31
  %v34 = vld [vmem:[%s1] sm:$0x1]
  %v35 = vlaneseq
  %v36 = vshrl.u32 %v35, 7
  %v37 = vsub.s32 0, %v36
  %v38 = vrot.slane %v34, %v37
  %v39 = vmul.f32 %v32, %v38
  %40 = vset.pattern.permute.xlu0 0
  %41 = vperm.xlu0 %40, %v18
  %v42 = vpop.permute.xlu0 %41
  %v44 = vmul.f32 %v42, %v39
  %v45 = vadd.f32 %v24, %v44
  %46 = vset.pattern.permute.xlu0 9
  %47 = vperm.xlu0 %46, %v18
  %v48 = vpop.permute.xlu0 %47
  %v50 = vmul.f32 %v48, %v39
  %v51 = vadd.f32 %v29, %v50
  %52 = vrot.lane.b32.xlu0 %v17, 8
  %v53 = vpop.permute.xlu0 %52
  %v55 = vld [vmem:[%s1 + $0x1] sm:$0x1]
  %v56 = vlaneseq
  %v57 = vshrl.u32 %v56, 7
  %v58 = vsub.s32 0, %v57
  %v59 = vrot.slane %v55, %v58
  %v60 = vmul.f32 %v53, %v59
  %61 = vset.pattern.permute.xlu0 1
  %62 = vperm.xlu0 %61, %v18
  %v63 = vpop.permute.xlu0 %62
  %v65 = vmul.f32 %v63, %v60
  %v66 = vadd.f32 %v45, %v65
  %67 = vset.pattern.permute.xlu0 10
  %68 = vperm.xlu0 %67, %v18
  %v69 = vpop.permute.xlu0 %68
  %v71 = vmul.f32 %v69, %v60
  %v72 = vadd.f32 %v51, %v71
  %73 = vrot.lane.b32.xlu0 %v17, 7
  %v74 = vpop.permute.xlu0 %73
  %v76 = vld [vmem:[%s1 + $0x2] sm:$0x1]
  %v77 = vlaneseq
  %v78 = vshrl.u32 %v77, 7
  %v79 = vsub.s32 0, %v78
  %v80 = vrot.slane %v76, %v79
  %v81 = vmul.f32 %v74, %v80
  %82 = vset.pattern.permute.xlu0 2
  %83 = vperm.xlu0 %82, %v18
  %v84 = vpop.permute.xlu0 %83
  %v86 = vmul.f32 %v84, %v81
  %v87 = vadd.f32 %v66, %v86
  %88 = vset.pattern.permute.xlu0 11
  %89 = vperm.xlu0 %88, %v18
  %v90 = vpop.permute.xlu0 %89
  %v92 = vmul.f32 %v90, %v81
  %v93 = vadd.f32 %v72, %v92
  %94 = vrot.lane.b32.xlu0 %v17, 1
  %v95 = vpop.permute.xlu0 %94
  %v97 = vld [vmem:[%s1 + $0x3] sm:$0x1]
  %v98 = vlaneseq
  %v99 = vshrl.u32 %v98, 7
  %v100 = vsub.s32 0, %v99
  %v101 = vrot.slane %v97, %v100
  %v102 = vmul.f32 %v95, %v101
  %103 = vset.pattern.permute.xlu0 3
  %104 = vperm.xlu0 %103, %v18
  %v105 = vpop.permute.xlu0 %104
  %v107 = vmul.f32 %v105, %v102
  %v108 = vadd.f32 %v87, %v107
  %109 = vset.pattern.permute.xlu0 12
  %110 = vperm.xlu0 %109, %v18
  %v111 = vpop.permute.xlu0 %110
  %v113 = vmul.f32 %v111, %v102
  %v114 = vadd.f32 %v93, %v113
  %115 = vrot.lane.b32.xlu0 %v17, 127
  %v116 = vpop.permute.xlu0 %115
  %v118 = vld [vmem:[%s1 + $0x5] sm:$0x1]
  %v119 = vlaneseq
  %v120 = vshrl.u32 %v119, 7
  %v121 = vsub.s32 0, %v120
  %v122 = vrot.slane %v118, %v121
  %v123 = vmul.f32 %v116, %v122
  %124 = vset.pattern.permute.xlu0 5
  %125 = vperm.xlu0 %124, %v18
  %v126 = vpop.permute.xlu0 %125
  %v128 = vmul.f32 %v126, %v123
  %v129 = vadd.f32 %v108, %v128
  %130 = vset.pattern.permute.xlu0 14
  %131 = vperm.xlu0 %130, %v18
  %v132 = vpop.permute.xlu0 %131
  %v134 = vmul.f32 %v132, %v123
  %v135 = vadd.f32 %v114, %v134
  %136 = vrot.lane.b32.xlu0 %v17, 121
  %v137 = vpop.permute.xlu0 %136
  %v139 = vld [vmem:[%s1 + $0x6] sm:$0x1]
  %v140 = vlaneseq
  %v141 = vshrl.u32 %v140, 7
  %v142 = vsub.s32 0, %v141
  %v143 = vrot.slane %v139, %v142
  %v144 = vmul.f32 %v137, %v143
  %145 = vset.pattern.permute.xlu0 6
  %146 = vperm.xlu0 %145, %v18
  %v147 = vpop.permute.xlu0 %146
  %v149 = vmul.f32 %v147, %v144
  %v150 = vadd.f32 %v129, %v149
  %151 = vset.pattern.permute.xlu0 15
  %152 = vperm.xlu0 %151, %v18
  %v153 = vpop.permute.xlu0 %152
  %v155 = vmul.f32 %v153, %v144
  %v156 = vadd.f32 %v135, %v155
  %157 = vrot.lane.b32.xlu0 %v17, 120
  %v158 = vpop.permute.xlu0 %157
  %v160 = vld [vmem:[%s1 + $0x7] sm:$0x1]
  %v161 = vlaneseq
  %v162 = vshrl.u32 %v161, 7
  %v163 = vsub.s32 0, %v162
  %v164 = vrot.slane %v160, %v163
  %v165 = vmul.f32 %v158, %v164
  %166 = vset.pattern.permute.xlu0 7
  %167 = vperm.xlu0 %166, %v18
  %v168 = vpop.permute.xlu0 %167
  %v170 = vmul.f32 %v168, %v165
  %v171 = vadd.f32 %v150, %v170
  %172 = vset.pattern.permute.xlu0 16
  %173 = vperm.xlu0 %172, %v18
  %v174 = vpop.permute.xlu0 %173
  %v176 = vmul.f32 %v174, %v165
  %v177 = vadd.f32 %v156, %v176
  %178 = vrot.lane.b32.xlu0 %v17, 119
  %v179 = vpop.permute.xlu0 %178
  %v181 = vld [vmem:[%s1 + $0x8] sm:$0x1]
  %v182 = vlaneseq
  %v183 = vshrl.u32 %v182, 7
  %v184 = vsub.s32 0, %v183
  %v185 = vrot.slane %v181, %v184
  %v186 = vmul.f32 %v179, %v185
  %187 = vset.pattern.permute.xlu0 8
  %188 = vperm.xlu0 %187, %v18
  %v189 = vpop.permute.xlu0 %188
  %v191 = vmul.f32 %v189, %v186
  %v192 = vadd.f32 %v171, %v191
  %193 = vset.pattern.permute.xlu0 17
  %194 = vperm.xlu0 %193, %v18
  %v195 = vpop.permute.xlu0 %194
  %v197 = vmul.f32 %v195, %v186
  %v198 = vadd.f32 %v177, %v197
  %v199 = vld [vmem:[%s3] sm:$0xff]
  %vm200 = vcmask 130048
  %v202 = vsel %vm200, %v199, 0
  %204 = vmatprep.subr.mxu0 0.0
  %205 = vmatpush1.msra.mxu0 %v192
  %206 = vmatprep.subr.mxu0 0.0
  %207 = vmatpush1.msra.mxu0 %v198
  %208 = vmatprep.subr.mxu0 0.0
  %209 = vmatpush1.msra.mxu0 0.0
  %210 = vmatprep.subr.mxu0 0.0
  %211 = vmatpush1.msra.mxu0 0.0
  %212 = vmatprep.subr.mxu0 0.0
  %213 = vmatpush1.msra.mxu0 0.0
  %214 = vmatprep.subr.mxu0 0.0
  %215 = vmatpush1.msra.mxu0 0.0
  %216 = vmatprep.subr.mxu0 0.0
  %217 = vmatpush1.msra.mxu0 0.0
  %218 = vmatprep.subr.mxu0 0.0
  %219 = vmatpush1.msra.mxu0 0.0
  %220 = vmatprep.subr.mxu0 0.0
  %221 = vmatpush1.msra.mxu0 0.0
  %222 = vmatprep.subr.mxu0 0.0
  %223 = vmatpush1.msra.mxu0 0.0
  %224 = vmatprep.subr.mxu0 0.0
  %225 = vmatpush1.msra.mxu0 0.0
  %226 = vmatprep.subr.mxu0 0.0
  %227 = vmatpush1.msra.mxu0 0.0
  %228 = vmatprep.subr.mxu0 0.0
  %229 = vmatpush1.msra.mxu0 0.0
  %230 = vmatprep.subr.mxu0 0.0
  %231 = vmatpush1.msra.mxu0 0.0
  %232 = vmatprep.subr.mxu0 0.0
  %233 = vmatpush1.msra.mxu0 0.0
  %234 = vmatprep.subr.mxu0 0.0
  %235 = vmatpush1.msra.mxu0 0.0
  %236 = vmatprep.subr.mxu0 0.0
  %237 = vmatpush1.msra.mxu0 0.0
  %238 = vmatprep.subr.mxu0 0.0
  %239 = vmatpush1.msra.mxu0 0.0
  %240 = vmatprep.subr.mxu0 0.0
  %241 = vmatpush1.msra.mxu0 0.0
  %242 = vmatprep.subr.mxu0 0.0
  %243 = vmatpush1.msra.mxu0 0.0
  %244 = vmatprep.subr.mxu0 0.0
  %245 = vmatpush1.msra.mxu0 0.0
  %246 = vmatprep.subr.mxu0 0.0
  %247 = vmatpush1.msra.mxu0 0.0
  %248 = vmatprep.subr.mxu0 0.0
  %249 = vmatpush1.msra.mxu0 0.0
  %250 = vmatprep.subr.mxu0 0.0
  %251 = vmatpush1.msra.mxu0 0.0
  %252 = vmatprep.subr.mxu0 0.0
  %253 = vmatpush1.msra.mxu0 0.0
  %254 = vmatprep.subr.mxu0 0.0
  %255 = vmatpush1.msra.mxu0 0.0
  %256 = vmatprep.subr.mxu0 0.0
  %257 = vmatpush1.msra.mxu0 0.0
  %258 = vmatprep.subr.mxu0 0.0
  %259 = vmatpush1.msra.mxu0 0.0
  %260 = vmatprep.subr.mxu0 0.0
  %261 = vmatpush1.msra.mxu0 0.0
  %262 = vmatprep.subr.mxu0 0.0
  %263 = vmatpush1.msra.mxu0 0.0
  %264 = vmatprep.subr.mxu0 0.0
  %265 = vmatpush1.msra.mxu0 0.0
  %266 = vmatprep.subr.mxu0 0.0
  %267 = vmatpush1.msra.mxu0 0.0
  %268 = vmatprep.mubr.f32.mxu0 0.0
  %269 = vmatmul.mubr.f32.gmra.mrb[0].mxu0 %v202
  %v270 = vpop.f32.mrb[0].mxu0
  %v271 = vadd.f32 0.0, %v270
  %v272 = vpop.f32.mrb[0].mxu0
  %273 = vdwg.mxu0
  %274 = vst [vmem:[%s4] sm:$0xff] %v271
  // Predicated region
  $region18: #{csp_bottleneck_forward.6} parent=0 // pred_check
    _
  $region19: #{csp_bottleneck_forward.6} parent=0 // pred_check_branch
    %276 = sbr.rel (0) target = $region21
  $region20: #{csp_bottleneck_forward.6} parent=0 // pred_region
    _
  $region21: #{csp_bottleneck_forward.6} parent=0 // pred_fallthru
    _
  // Predicated region
  $region22: #{csp_bottleneck_forward.6} parent=0 // pred_check
    _
  $region23: #{csp_bottleneck_forward.6} parent=0 // pred_check_branch
    %278 = sbr.rel (0) target = $region25
  $region24: #{csp_bottleneck_forward.6} parent=0 // pred_region
    _
  $region25: #{csp_bottleneck_forward.6} parent=0 // pred_fallthru
    _

// kernel: csp_bottleneck_forward.8
$region0: #{csp_bottleneck_forward.8}
  #allocation0 [shape = 'u32[]', space=smem, size = 0x4, offset = 0x4, fixed_abs, tag = 'smem constant byte address 0x4 - core index']
  #allocation1 [shape = 'u32[144,128]{1,0:T(1,128)}', space=vmem, size = 0x12000, scoped, tag = 'internal scratch']
  %s0 = inlined_call_operand.vmem [shape: f32[8,128], index: 0, kind: input, shape index: {}]
  %s1 = inlined_call_operand.vmem [shape: f32[9,128], index: 1, kind: input, shape index: {}]
  %s2 = inlined_call_operand.vmem [shape: f32[8,18], index: 2, kind: input, shape index: {}]
  %s3 = inlined_call_operand.vmem [shape: f32[8,16], index: 3, kind: input, shape index: {}]
  %s4 = inlined_call_operand.vmem [shape: f32[8,128], index: 4, kind: input, shape index: {}]
  %s5 = inlined_call_operand.vmem [shape: f32[8,128], index: 5, kind: output, shape index: {}]
  %s6 = sld [smem:[#allocation0]]
  $region30: #{csp_bottleneck_forward.8} parent=0
    _
  %s8 = ssub.s32 1, %s6
  %s9 = scalar_select 0, %s8, %s6
  // Predicated region
  $region2: #{csp_bottleneck_forward.8} parent=0 // pred_check
    _
  $region3: #{csp_bottleneck_forward.8} parent=0 // pred_check_branch
    %11 = sbr.rel (0) target = $region5
  $region4: #{csp_bottleneck_forward.8} parent=0 // pred_region
    _
  $region5: #{csp_bottleneck_forward.8} parent=0 // pred_fallthru
    _
  // Predicated region
  $region6: #{csp_bottleneck_forward.8} parent=0 // pred_check
    _
  $region7: #{csp_bottleneck_forward.8} parent=0 // pred_check_branch
    %13 = sbr.rel (0) target = $region9
  $region8: #{csp_bottleneck_forward.8} parent=0 // pred_region
    _
  $region9: #{csp_bottleneck_forward.8} parent=0 // pred_fallthru
    _
  // Predicated region
  $region10: #{csp_bottleneck_forward.8} parent=0 // pred_check
    _
  $region11: #{csp_bottleneck_forward.8} parent=0 // pred_check_branch
    %15 = sbr.rel (0) target = $region13
  $region12: #{csp_bottleneck_forward.8} parent=0 // pred_region
    _
  $region13: #{csp_bottleneck_forward.8} parent=0 // pred_fallthru
    _
  // Predicated region
  $region14: #{csp_bottleneck_forward.8} parent=0 // pred_check
    _
  $region15: #{csp_bottleneck_forward.8} parent=0 // pred_check_branch
    %17 = sbr.rel (0) target = $region17
  $region16: #{csp_bottleneck_forward.8} parent=0 // pred_region
    _
  $region17: #{csp_bottleneck_forward.8} parent=0 // pred_fallthru
    _
  // Predicated region
  $region18: #{csp_bottleneck_forward.8} parent=0 // pred_check
    _
  $region19: #{csp_bottleneck_forward.8} parent=0 // pred_check_branch
    %19 = sbr.rel (0) target = $region21
  $region20: #{csp_bottleneck_forward.8} parent=0 // pred_region
    _
  $region21: #{csp_bottleneck_forward.8} parent=0 // pred_fallthru
    _
  %v20 = vld [vmem:[%s0] sm:$0xff]
  %v21 = vld [vmem:[%s2] sm:$0xff]
  %23 = vset.pattern.permute.xlu0 4
  %24 = vperm.xlu0 %23, %v21
  %v25 = vpop.permute.xlu0 %24
  %v27 = vmul.f32 %v25, %v20
  %28 = vset.pattern.permute.xlu0 13
  %29 = vperm.xlu0 %28, %v21
  %v30 = vpop.permute.xlu0 %29
  %v32 = vmul.f32 %v30, %v20
  %34 = vrot.lane.b32.xlu0 %v20, 9
  %v35 = vpop.permute.xlu0 %34
  %v37 = vld [vmem:[%s1] sm:$0x1]
  %v38 = vlaneseq
  %v39 = vshrl.u32 %v38, 7
  %v40 = vsub.s32 0, %v39
  %v41 = vrot.slane %v37, %v40
  %v42 = vmul.f32 %v35, %v41
  %43 = vset.pattern.permute.xlu0 0
  %44 = vperm.xlu0 %43, %v21
  %v45 = vpop.permute.xlu0 %44
  %v47 = vmul.f32 %v45, %v42
  %v48 = vadd.f32 %v27, %v47
  %49 = vset.pattern.permute.xlu0 9
  %50 = vperm.xlu0 %49, %v21
  %v51 = vpop.permute.xlu0 %50
  %v53 = vmul.f32 %v51, %v42
  %v54 = vadd.f32 %v32, %v53
  %55 = vrot.lane.b32.xlu0 %v20, 8
  %v56 = vpop.permute.xlu0 %55
  %v58 = vld [vmem:[%s1 + $0x1] sm:$0x1]
  %v59 = vlaneseq
  %v60 = vshrl.u32 %v59, 7
  %v61 = vsub.s32 0, %v60
  %v62 = vrot.slane %v58, %v61
  %v63 = vmul.f32 %v56, %v62
  %64 = vset.pattern.permute.xlu0 1
  %65 = vperm.xlu0 %64, %v21
  %v66 = vpop.permute.xlu0 %65
  %v68 = vmul.f32 %v66, %v63
  %v69 = vadd.f32 %v48, %v68
  %70 = vset.pattern.permute.xlu0 10
  %71 = vperm.xlu0 %70, %v21
  %v72 = vpop.permute.xlu0 %71
  %v74 = vmul.f32 %v72, %v63
  %v75 = vadd.f32 %v54, %v74
  %76 = vrot.lane.b32.xlu0 %v20, 7
  %v77 = vpop.permute.xlu0 %76
  %v79 = vld [vmem:[%s1 + $0x2] sm:$0x1]
  %v80 = vlaneseq
  %v81 = vshrl.u32 %v80, 7
  %v82 = vsub.s32 0, %v81
  %v83 = vrot.slane %v79, %v82
  %v84 = vmul.f32 %v77, %v83
  %85 = vset.pattern.permute.xlu0 2
  %86 = vperm.xlu0 %85, %v21
  %v87 = vpop.permute.xlu0 %86
  %v89 = vmul.f32 %v87, %v84
  %v90 = vadd.f32 %v69, %v89
  %91 = vset.pattern.permute.xlu0 11
  %92 = vperm.xlu0 %91, %v21
  %v93 = vpop.permute.xlu0 %92
  %v95 = vmul.f32 %v93, %v84
  %v96 = vadd.f32 %v75, %v95
  %97 = vrot.lane.b32.xlu0 %v20, 1
  %v98 = vpop.permute.xlu0 %97
  %v100 = vld [vmem:[%s1 + $0x3] sm:$0x1]
  %v101 = vlaneseq
  %v102 = vshrl.u32 %v101, 7
  %v103 = vsub.s32 0, %v102
  %v104 = vrot.slane %v100, %v103
  %v105 = vmul.f32 %v98, %v104
  %106 = vset.pattern.permute.xlu0 3
  %107 = vperm.xlu0 %106, %v21
  %v108 = vpop.permute.xlu0 %107
  %v110 = vmul.f32 %v108, %v105
  %v111 = vadd.f32 %v90, %v110
  %112 = vset.pattern.permute.xlu0 12
  %113 = vperm.xlu0 %112, %v21
  %v114 = vpop.permute.xlu0 %113
  %v116 = vmul.f32 %v114, %v105
  %v117 = vadd.f32 %v96, %v116
  %118 = vrot.lane.b32.xlu0 %v20, 127
  %v119 = vpop.permute.xlu0 %118
  %v121 = vld [vmem:[%s1 + $0x5] sm:$0x1]
  %v122 = vlaneseq
  %v123 = vshrl.u32 %v122, 7
  %v124 = vsub.s32 0, %v123
  %v125 = vrot.slane %v121, %v124
  %v126 = vmul.f32 %v119, %v125
  %127 = vset.pattern.permute.xlu0 5
  %128 = vperm.xlu0 %127, %v21
  %v129 = vpop.permute.xlu0 %128
  %v131 = vmul.f32 %v129, %v126
  %v132 = vadd.f32 %v111, %v131
  %133 = vset.pattern.permute.xlu0 14
  %134 = vperm.xlu0 %133, %v21
  %v135 = vpop.permute.xlu0 %134
  %v137 = vmul.f32 %v135, %v126
  %v138 = vadd.f32 %v117, %v137
  %139 = vrot.lane.b32.xlu0 %v20, 121
  %v140 = vpop.permute.xlu0 %139
  %v142 = vld [vmem:[%s1 + $0x6] sm:$0x1]
  %v143 = vlaneseq
  %v144 = vshrl.u32 %v143, 7
  %v145 = vsub.s32 0, %v144
  %v146 = vrot.slane %v142, %v145
  %v147 = vmul.f32 %v140, %v146
  %148 = vset.pattern.permute.xlu0 6
  %149 = vperm.xlu0 %148, %v21
  %v150 = vpop.permute.xlu0 %149
  %v152 = vmul.f32 %v150, %v147
  %v153 = vadd.f32 %v132, %v152
  %154 = vset.pattern.permute.xlu0 15
  %155 = vperm.xlu0 %154, %v21
  %v156 = vpop.permute.xlu0 %155
  %v158 = vmul.f32 %v156, %v147
  %v159 = vadd.f32 %v138, %v158
  %160 = vrot.lane.b32.xlu0 %v20, 120
  %v161 = vpop.permute.xlu0 %160
  %v163 = vld [vmem:[%s1 + $0x7] sm:$0x1]
  %v164 = vlaneseq
  %v165 = vshrl.u32 %v164, 7
  %v166 = vsub.s32 0, %v165
  %v167 = vrot.slane %v163, %v166
  %v168 = vmul.f32 %v161, %v167
  %169 = vset.pattern.permute.xlu0 7
  %170 = vperm.xlu0 %169, %v21
  %v171 = vpop.permute.xlu0 %170
  %v173 = vmul.f32 %v171, %v168
  %v174 = vadd.f32 %v153, %v173
  %175 = vset.pattern.permute.xlu0 16
  %176 = vperm.xlu0 %175, %v21
  %v177 = vpop.permute.xlu0 %176
  %v179 = vmul.f32 %v177, %v168
  %v180 = vadd.f32 %v159, %v179
  %181 = vrot.lane.b32.xlu0 %v20, 119
  %v182 = vpop.permute.xlu0 %181
  %v184 = vld [vmem:[%s1 + $0x8] sm:$0x1]
  %v185 = vlaneseq
  %v186 = vshrl.u32 %v185, 7
  %v187 = vsub.s32 0, %v186
  %v188 = vrot.slane %v184, %v187
  %v189 = vmul.f32 %v182, %v188
  %190 = vset.pattern.permute.xlu0 8
  %191 = vperm.xlu0 %190, %v21
  %v192 = vpop.permute.xlu0 %191
  %v194 = vmul.f32 %v192, %v189
  %v195 = vadd.f32 %v174, %v194
  %196 = vset.pattern.permute.xlu0 17
  %197 = vperm.xlu0 %196, %v21
  %v198 = vpop.permute.xlu0 %197
  %v200 = vmul.f32 %v198, %v189
  %v201 = vadd.f32 %v180, %v200
  %v202 = vld [vmem:[%s3] sm:$0xff]
  %v203 = vld [vmem:[%s4] sm:$0xff]
  %vm204 = vcmask 130048
  %v206 = vsel %vm204, %v202, 0
  %208 = vmatprep.subr.mxu0 0.0
  %209 = vmatpush1.msra.mxu0 %v195
  %210 = vmatprep.subr.mxu0 0.0
  %211 = vmatpush1.msra.mxu0 %v201
  %212 = vmatprep.subr.mxu0 0.0
  %213 = vmatpush1.msra.mxu0 0.0
  %214 = vmatprep.subr.mxu0 0.0
  %215 = vmatpush1.msra.mxu0 0.0
  %216 = vmatprep.subr.mxu0 0.0
  %217 = vmatpush1.msra.mxu0 0.0
  %218 = vmatprep.subr.mxu0 0.0
  %219 = vmatpush1.msra.mxu0 0.0
  %220 = vmatprep.subr.mxu0 0.0
  %221 = vmatpush1.msra.mxu0 0.0
  %222 = vmatprep.subr.mxu0 0.0
  %223 = vmatpush1.msra.mxu0 0.0
  %224 = vmatprep.subr.mxu0 0.0
  %225 = vmatpush1.msra.mxu0 0.0
  %226 = vmatprep.subr.mxu0 0.0
  %227 = vmatpush1.msra.mxu0 0.0
  %228 = vmatprep.subr.mxu0 0.0
  %229 = vmatpush1.msra.mxu0 0.0
  %230 = vmatprep.subr.mxu0 0.0
  %231 = vmatpush1.msra.mxu0 0.0
  %232 = vmatprep.subr.mxu0 0.0
  %233 = vmatpush1.msra.mxu0 0.0
  %234 = vmatprep.subr.mxu0 0.0
  %235 = vmatpush1.msra.mxu0 0.0
  %236 = vmatprep.subr.mxu0 0.0
  %237 = vmatpush1.msra.mxu0 0.0
  %238 = vmatprep.subr.mxu0 0.0
  %239 = vmatpush1.msra.mxu0 0.0
  %240 = vmatprep.subr.mxu0 0.0
  %241 = vmatpush1.msra.mxu0 0.0
  %242 = vmatprep.subr.mxu0 0.0
  %243 = vmatpush1.msra.mxu0 0.0
  %244 = vmatprep.subr.mxu0 0.0
  %245 = vmatpush1.msra.mxu0 0.0
  %246 = vmatprep.subr.mxu0 0.0
  %247 = vmatpush1.msra.mxu0 0.0
  %248 = vmatprep.subr.mxu0 0.0
  %249 = vmatpush1.msra.mxu0 0.0
  %250 = vmatprep.subr.mxu0 0.0
  %251 = vmatpush1.msra.mxu0 0.0
  %252 = vmatprep.subr.mxu0 0.0
  %253 = vmatpush1.msra.mxu0 0.0
  %254 = vmatprep.subr.mxu0 0.0
  %255 = vmatpush1.msra.mxu0 0.0
  %256 = vmatprep.subr.mxu0 0.0
  %257 = vmatpush1.msra.mxu0 0.0
  %258 = vmatprep.subr.mxu0 0.0
  %259 = vmatpush1.msra.mxu0 0.0
  %260 = vmatprep.subr.mxu0 0.0
  %261 = vmatpush1.msra.mxu0 0.0
  %262 = vmatprep.subr.mxu0 0.0
  %263 = vmatpush1.msra.mxu0 0.0
  %264 = vmatprep.subr.mxu0 0.0
  %265 = vmatpush1.msra.mxu0 0.0
  %266 = vmatprep.subr.mxu0 0.0
  %267 = vmatpush1.msra.mxu0 0.0
  %268 = vmatprep.subr.mxu0 0.0
  %269 = vmatpush1.msra.mxu0 0.0
  %270 = vmatprep.subr.mxu0 0.0
  %271 = vmatpush1.msra.mxu0 0.0
  %272 = vmatprep.mubr.f32.mxu0 0.0
  %273 = vmatmul.mubr.f32.gmra.mrb[0].mxu0 %v206
  %v274 = vpop.f32.mrb[0].mxu0
  %v275 = vadd.f32 %v203, %v274
  %v276 = vpop.f32.mrb[0].mxu0
  %277 = vdwg.mxu0
  %278 = vst [vmem:[%s5] sm:$0xff] %v275
  // Predicated region
  $region22: #{csp_bottleneck_forward.8} parent=0 // pred_check
    _
  $region23: #{csp_bottleneck_forward.8} parent=0 // pred_check_branch
    %280 = sbr.rel (0) target = $region25
  $region24: #{csp_bottleneck_forward.8} parent=0 // pred_region
    _
  $region25: #{csp_bottleneck_forward.8} parent=0 // pred_fallthru
    _
  // Predicated region
  $region26: #{csp_bottleneck_forward.8} parent=0 // pred_check
    _
  $region27: #{csp_bottleneck_forward.8} parent=0 // pred_check_branch
    %282 = sbr.rel (0) target = $region29
  $region28: #{csp_bottleneck_forward.8} parent=0 // pred_region
    _
  $region29: #{csp_bottleneck_forward.8} parent=0 // pred_fallthru
    _

// kernel: csp_bottleneck_forward.9
$region0: #{csp_bottleneck_forward.9}
  #allocation0 [shape = 'u32[]', space=smem, size = 0x4, offset = 0x4, fixed_abs, tag = 'smem constant byte address 0x4 - core index']
  #allocation1 [shape = 'u32[144,128]{1,0:T(1,128)}', space=vmem, size = 0x12000, scoped, tag = 'internal scratch']
  %s0 = inlined_call_operand.vmem [shape: f32[8,128], index: 0, kind: input, shape index: {}]
  %s1 = inlined_call_operand.vmem [shape: f32[8,128], index: 1, kind: input, shape index: {}]
  %s2 = inlined_call_operand.vmem [shape: f32[16,16], index: 2, kind: input, shape index: {}]
  %s3 = inlined_call_operand.vmem [shape: f32[16,1], index: 3, kind: input, shape index: {}]
  %s4 = inlined_call_operand.vmem [shape: f32[9,128], index: 4, kind: input, shape index: {}]
  %s5 = inlined_call_operand.vmem [shape: f32[16,18], index: 5, kind: input, shape index: {}]
  %s6 = inlined_call_operand.vmem [shape: f32[16,32], index: 6, kind: input, shape index: {}]
  %s7 = inlined_call_operand.vmem [shape: f32[16,128], index: 7, kind: output, shape index: {}]
  %s8 = sld [smem:[#allocation0]]
  $region38: #{csp_bottleneck_forward.9} parent=0
    _
  %s10 = ssub.s32 1, %s8
  %s11 = scalar_select 0, %s10, %s8
  // Predicated region
  $region2: #{csp_bottleneck_forward.9} parent=0 // pred_check
    _
  $region3: #{csp_bottleneck_forward.9} parent=0 // pred_check_branch
    %13 = sbr.rel (0) target = $region5
  $region4: #{csp_bottleneck_forward.9} parent=0 // pred_region
    _
  $region5: #{csp_bottleneck_forward.9} parent=0 // pred_fallthru
    _
  // Predicated region
  $region6: #{csp_bottleneck_forward.9} parent=0 // pred_check
    _
  $region7: #{csp_bottleneck_forward.9} parent=0 // pred_check_branch
    %15 = sbr.rel (0) target = $region9
  $region8: #{csp_bottleneck_forward.9} parent=0 // pred_region
    _
  $region9: #{csp_bottleneck_forward.9} parent=0 // pred_fallthru
    _
  // Predicated region
  $region10: #{csp_bottleneck_forward.9} parent=0 // pred_check
    _
  $region11: #{csp_bottleneck_forward.9} parent=0 // pred_check_branch
    %17 = sbr.rel (0) target = $region13
  $region12: #{csp_bottleneck_forward.9} parent=0 // pred_region
    _
  $region13: #{csp_bottleneck_forward.9} parent=0 // pred_fallthru
    _
  // Predicated region
  $region14: #{csp_bottleneck_forward.9} parent=0 // pred_check
    _
  $region15: #{csp_bottleneck_forward.9} parent=0 // pred_check_branch
    %19 = sbr.rel (0) target = $region17
  $region16: #{csp_bottleneck_forward.9} parent=0 // pred_region
    _
  $region17: #{csp_bottleneck_forward.9} parent=0 // pred_fallthru
    _
  // Predicated region
  $region18: #{csp_bottleneck_forward.9} parent=0 // pred_check
    _
  $region19: #{csp_bottleneck_forward.9} parent=0 // pred_check_branch
    %21 = sbr.rel (0) target = $region21
  $region20: #{csp_bottleneck_forward.9} parent=0 // pred_region
    _
  $region21: #{csp_bottleneck_forward.9} parent=0 // pred_fallthru
    _
  // Predicated region
  $region22: #{csp_bottleneck_forward.9} parent=0 // pred_check
    _
  $region23: #{csp_bottleneck_forward.9} parent=0 // pred_check_branch
    %23 = sbr.rel (0) target = $region25
  $region24: #{csp_bottleneck_forward.9} parent=0 // pred_region
    _
  $region25: #{csp_bottleneck_forward.9} parent=0 // pred_fallthru
    _
  // Predicated region
  $region26: #{csp_bottleneck_forward.9} parent=0 // pred_check
    _
  $region27: #{csp_bottleneck_forward.9} parent=0 // pred_check_branch
    %25 = sbr.rel (0) target = $region29
  $region28: #{csp_bottleneck_forward.9} parent=0 // pred_region
    _
  $region29: #{csp_bottleneck_forward.9} parent=0 // pred_fallthru
    _
  %v26 = vld [vmem:[%s0] sm:$0xff]
  %v27 = vld [vmem:[%s1] sm:$0xff]
  %v28 = vld [vmem:[%s2] sm:$0xff]
  %v29 = vld [vmem:[%s2 + $0x8] sm:$0xff]
  %v30 = vld [vmem:[%s3] sm:$0xff]
  %v31 = vld [vmem:[%s3 + $0x8] sm:$0xff]
  %33 = vset.pattern.permute.xlu0 0
  %34 = vperm.xlu0 %33, %v30
  %v35 = vpop.permute.xlu0 %34
  %38 = vset.pattern.permute.xlu0 0
  %39 = vperm.xlu0 %38, %v31
  %v40 = vpop.permute.xlu0 %39
  %vm42 = vcmask 130048
  %v44 = vsel %vm42, %v28, 0
  %v47 = vsel %vm42, %v29, 0
  %49 = vmatprep.subr.mxu0 0.0
  %50 = vmatpush1.msra.mxu0 %v26
  %51 = vmatprep.subr.mxu0 0.0
  %52 = vmatpush1.msra.mxu0 %v27
  %53 = vmatprep.subr.mxu0 0.0
  %54 = vmatpush1.msra.mxu0 0.0
  %55 = vmatprep.subr.mxu0 0.0
  %56 = vmatpush1.msra.mxu0 0.0
  %57 = vmatprep.subr.mxu0 0.0
  %58 = vmatpush1.msra.mxu0 0.0
  %59 = vmatprep.subr.mxu0 0.0
  %60 = vmatpush1.msra.mxu0 0.0
  %61 = vmatprep.subr.mxu0 0.0
  %62 = vmatpush1.msra.mxu0 0.0
  %63 = vmatprep.subr.mxu0 0.0
  %64 = vmatpush1.msra.mxu0 0.0
  %65 = vmatprep.subr.mxu0 0.0
  %66 = vmatpush1.msra.mxu0 0.0
  %67 = vmatprep.subr.mxu0 0.0
  %68 = vmatpush1.msra.mxu0 0.0
  %69 = vmatprep.subr.mxu0 0.0
  %70 = vmatpush1.msra.mxu0 0.0
  %71 = vmatprep.subr.mxu0 0.0
  %72 = vmatpush1.msra.mxu0 0.0
  %73 = vmatprep.subr.mxu0 0.0
  %74 = vmatpush1.msra.mxu0 0.0
  %75 = vmatprep.subr.mxu0 0.0
  %76 = vmatpush1.msra.mxu0 0.0
  %77 = vmatprep.subr.mxu0 0.0
  %78 = vmatpush1.msra.mxu0 0.0
  %79 = vmatprep.subr.mxu0 0.0
  %80 = vmatpush1.msra.mxu0 0.0
  %81 = vmatprep.subr.mxu0 0.0
  %82 = vmatpush1.msra.mxu0 0.0
  %83 = vmatprep.subr.mxu0 0.0
  %84 = vmatpush1.msra.mxu0 0.0
  %85 = vmatprep.subr.mxu0 0.0
  %86 = vmatpush1.msra.mxu0 0.0
  %87 = vmatprep.subr.mxu0 0.0
  %88 = vmatpush1.msra.mxu0 0.0
  %89 = vmatprep.subr.mxu0 0.0
  %90 = vmatpush1.msra.mxu0 0.0
  %91 = vmatprep.subr.mxu0 0.0
  %92 = vmatpush1.msra.mxu0 0.0
  %93 = vmatprep.subr.mxu0 0.0
  %94 = vmatpush1.msra.mxu0 0.0
  %95 = vmatprep.subr.mxu0 0.0
  %96 = vmatpush1.msra.mxu0 0.0
  %97 = vmatprep.subr.mxu0 0.0
  %98 = vmatpush1.msra.mxu0 0.0
  %99 = vmatprep.subr.mxu0 0.0
  %100 = vmatpush1.msra.mxu0 0.0
  %101 = vmatprep.subr.mxu0 0.0
  %102 = vmatpush1.msra.mxu0 0.0
  %103 = vmatprep.subr.mxu0 0.0
  %104 = vmatpush1.msra.mxu0 0.0
  %105 = vmatprep.subr.mxu0 0.0
  %106 = vmatpush1.msra.mxu0 0.0
  %107 = vmatprep.subr.mxu0 0.0
  %108 = vmatpush1.msra.mxu0 0.0
  %109 = vmatprep.subr.mxu0 0.0
  %110 = vmatpush1.msra.mxu0 0.0
  %111 = vmatprep.subr.mxu0 0.0
  %112 = vmatpush1.msra.mxu0 0.0
  %113 = vmatprep.mubr.f32.mxu0 0.0
  %114 = vmatmul.mubr.f32.gmra.mrb[0].mxu0 %v44
  %v115 = vpop.f32.mrb[0].mxu0
  %v116 = vadd.f32 %v35, %v115
  %v117 = vpop.f32.mrb[0].mxu0
  %118 = vmatprep.mubr.f32.mxu0 0.0
  %119 = vmatmul.mubr.f32.gmra.mrb[0].mxu0 %v47
  %v120 = vpop.f32.mrb[0].mxu0
  %v121 = vadd.f32 %v40, %v120
  %v122 = vpop.f32.mrb[0].mxu0
  %123 = vdwg.mxu0
  %v124 = vsub.f32 0.0, %v116
  %v125 = vsub.f32 0.0, %v121
  %v126 = vmul.f32 %v124, 1.442695
  %v127 = vpow.pop %v126
  %v128 = vmul.f32 %v125, 1.442695
  %v129 = vpow.pop %v128
  %v130 = vadd.f32 %v127, 1.0
  %v131 = vadd.f32 %v129, 1.0
  %v132 = vrcp.pop %v130
  %v133 = vmul.f32 %v116, %v132
  %v134 = vrcp.pop %v131
  %v135 = vmul.f32 %v121, %v134
  %v136 = vld [vmem:[%s5] sm:$0xff]
  %v137 = vld [vmem:[%s5 + $0x8] sm:$0xff]
  %139 = vset.pattern.permute.xlu0 4
  %140 = vperm.xlu0 %139, %v136
  %v141 = vpop.permute.xlu0 %140
  %144 = vset.pattern.permute.xlu0 4
  %145 = vperm.xlu0 %144, %v137
  %v146 = vpop.permute.xlu0 %145
  %v148 = vmul.f32 %v141, %v133
  %v149 = vmul.f32 %v146, %v135
  %150 = vset.pattern.permute.xlu0 13
  %151 = vperm.xlu0 %150, %v136
  %v152 = vpop.permute.xlu0 %151
  %154 = vset.pattern.permute.xlu0 13
  %155 = vperm.xlu0 %154, %v137
  %v156 = vpop.permute.xlu0 %155
  %v158 = vmul.f32 %v152, %v133
  %v159 = vmul.f32 %v156, %v135
  %162 = vrot.lane.b32.xlu0 %v133, 9
  %v163 = vpop.permute.xlu0 %162
  %164 = vrot.lane.b32.xlu0 %v135, 9
  %v165 = vpop.permute.xlu0 %164
  %v168 = vld [vmem:[%s4] sm:$0x1]
  %v169 = vlaneseq
  %v170 = vshrl.u32 %v169, 7
  %v171 = vsub.s32 0, %v170
  %v172 = vrot.slane %v168, %v171
  %v173 = vmul.f32 %v163, %v172
  %v174 = vmul.f32 %v165, %v172
  %175 = vset.pattern.permute.xlu0 0
  %176 = vperm.xlu0 %175, %v136
  %v177 = vpop.permute.xlu0 %176
  %179 = vset.pattern.permute.xlu0 0
  %180 = vperm.xlu0 %179, %v137
  %v181 = vpop.permute.xlu0 %180
  %v183 = vmul.f32 %v177, %v173
  %v184 = vmul.f32 %v181, %v174
  %v185 = vadd.f32 %v148, %v183
  %v186 = vadd.f32 %v149, %v184
  %187 = vset.pattern.permute.xlu0 9
  %188 = vperm.xlu0 %187, %v136
  %v189 = vpop.permute.xlu0 %188
  %191 = vset.pattern.permute.xlu0 9
  %192 = vperm.xlu0 %191, %v137
  %v193 = vpop.permute.xlu0 %192
  %v195 = vmul.f32 %v189, %v173
  %v196 = vmul.f32 %v193, %v174
  %v197 = vadd.f32 %v158, %v195
  %v198 = vadd.f32 %v159, %v196
  %199 = vrot.lane.b32.xlu0 %v133, 8
  %v200 = vpop.permute.xlu0 %199
  %201 = vrot.lane.b32.xlu0 %v135, 8
  %v202 = vpop.permute.xlu0 %201
  %v205 = vld [vmem:[%s4 + $0x1] sm:$0x1]
  %v206 = vlaneseq
  %v207 = vshrl.u32 %v206, 7
  %v208 = vsub.s32 0, %v207
  %v209 = vrot.slane %v205, %v208
  %v210 = vmul.f32 %v200, %v209
  %v211 = vmul.f32 %v202, %v209
  %212 = vset.pattern.permute.xlu0 1
  %213 = vperm.xlu0 %212, %v136
  %v214 = vpop.permute.xlu0 %213
  %216 = vset.pattern.permute.xlu0 1
  %217 = vperm.xlu0 %216, %v137
  %v218 = vpop.permute.xlu0 %217
  %v220 = vmul.f32 %v214, %v210
  %v221 = vmul.f32 %v218, %v211
  %v222 = vadd.f32 %v185, %v220
  %v223 = vadd.f32 %v186, %v221
  %224 = vset.pattern.permute.xlu0 10
  %225 = vperm.xlu0 %224, %v136
  %v226 = vpop.permute.xlu0 %225
  %228 = vset.pattern.permute.xlu0 10
  %229 = vperm.xlu0 %228, %v137
  %v230 = vpop.permute.xlu0 %229
  %v232 = vmul.f32 %v226, %v210
  %v233 = vmul.f32 %v230, %v211
  %v234 = vadd.f32 %v197, %v232
  %v235 = vadd.f32 %v198, %v233
  %236 = vrot.lane.b32.xlu0 %v133, 7
  %v237 = vpop.permute.xlu0 %236
  %238 = vrot.lane.b32.xlu0 %v135, 7
  %v239 = vpop.permute.xlu0 %238
  %v242 = vld [vmem:[%s4 + $0x2] sm:$0x1]
  %v243 = vlaneseq
  %v244 = vshrl.u32 %v243, 7
  %v245 = vsub.s32 0, %v244
  %v246 = vrot.slane %v242, %v245
  %v247 = vmul.f32 %v237, %v246
  %v248 = vmul.f32 %v239, %v246
  %249 = vset.pattern.permute.xlu0 2
  %250 = vperm.xlu0 %249, %v136
  %v251 = vpop.permute.xlu0 %250
  %253 = vset.pattern.permute.xlu0 2
  %254 = vperm.xlu0 %253, %v137
  %v255 = vpop.permute.xlu0 %254
  %v257 = vmul.f32 %v251, %v247
  %v258 = vmul.f32 %v255, %v248
  %v259 = vadd.f32 %v222, %v257
  %v260 = vadd.f32 %v223, %v258
  %261 = vset.pattern.permute.xlu0 11
  %262 = vperm.xlu0 %261, %v136
  %v263 = vpop.permute.xlu0 %262
  %265 = vset.pattern.permute.xlu0 11
  %266 = vperm.xlu0 %265, %v137
  %v267 = vpop.permute.xlu0 %266
  %v269 = vmul.f32 %v263, %v247
  %v270 = vmul.f32 %v267, %v248
  %v271 = vadd.f32 %v234, %v269
  %v272 = vadd.f32 %v235, %v270
  %273 = vrot.lane.b32.xlu0 %v133, 1
  %v274 = vpop.permute.xlu0 %273
  %275 = vrot.lane.b32.xlu0 %v135, 1
  %v276 = vpop.permute.xlu0 %275
  %v279 = vld [vmem:[%s4 + $0x3] sm:$0x1]
  %v280 = vlaneseq
  %v281 = vshrl.u32 %v280, 7
  %v282 = vsub.s32 0, %v281
  %v283 = vrot.slane %v279, %v282
  %v284 = vmul.f32 %v274, %v283
  %v285 = vmul.f32 %v276, %v283
  %286 = vset.pattern.permute.xlu0 3
  %287 = vperm.xlu0 %286, %v136
  %v288 = vpop.permute.xlu0 %287
  %290 = vset.pattern.permute.xlu0 3
  %291 = vperm.xlu0 %290, %v137
  %v292 = vpop.permute.xlu0 %291
  %v294 = vmul.f32 %v288, %v284
  %v295 = vmul.f32 %v292, %v285
  %v296 = vadd.f32 %v259, %v294
  %v297 = vadd.f32 %v260, %v295
  %298 = vset.pattern.permute.xlu0 12
  %299 = vperm.xlu0 %298, %v136
  %v300 = vpop.permute.xlu0 %299
  %302 = vset.pattern.permute.xlu0 12
  %303 = vperm.xlu0 %302, %v137
  %v304 = vpop.permute.xlu0 %303
  %v306 = vmul.f32 %v300, %v284
  %v307 = vmul.f32 %v304, %v285
  %v308 = vadd.f32 %v271, %v306
  %v309 = vadd.f32 %v272, %v307
  %310 = vrot.lane.b32.xlu0 %v133, 127
  %v311 = vpop.permute.xlu0 %310
  %312 = vrot.lane.b32.xlu0 %v135, 127
  %v313 = vpop.permute.xlu0 %312
  %v316 = vld [vmem:[%s4 + $0x5] sm:$0x1]
  %v317 = vlaneseq
  %v318 = vshrl.u32 %v317, 7
  %v319 = vsub.s32 0, %v318
  %v320 = vrot.slane %v316, %v319
  %v321 = vmul.f32 %v311, %v320
  %v322 = vmul.f32 %v313, %v320
  %323 = vset.pattern.permute.xlu0 5
  %324 = vperm.xlu0 %323, %v136
  %v325 = vpop.permute.xlu0 %324
  %327 = vset.pattern.permute.xlu0 5
  %328 = vperm.xlu0 %327, %v137
  %v329 = vpop.permute.xlu0 %328
  %v331 = vmul.f32 %v325, %v321
  %v332 = vmul.f32 %v329, %v322
  %v333 = vadd.f32 %v296, %v331
  %v334 = vadd.f32 %v297, %v332
  %335 = vset.pattern.permute.xlu0 14
  %336 = vperm.xlu0 %335, %v136
  %v337 = vpop.permute.xlu0 %336
  %339 = vset.pattern.permute.xlu0 14
  %340 = vperm.xlu0 %339, %v137
  %v341 = vpop.permute.xlu0 %340
  %v343 = vmul.f32 %v337, %v321
  %v344 = vmul.f32 %v341, %v322
  %v345 = vadd.f32 %v308, %v343
  %v346 = vadd.f32 %v309, %v344
  %347 = vrot.lane.b32.xlu0 %v133, 121
  %v348 = vpop.permute.xlu0 %347
  %349 = vrot.lane.b32.xlu0 %v135, 121
  %v350 = vpop.permute.xlu0 %349
  %v353 = vld [vmem:[%s4 + $0x6] sm:$0x1]
  %v354 = vlaneseq
  %v355 = vshrl.u32 %v354, 7
  %v356 = vsub.s32 0, %v355
  %v357 = vrot.slane %v353, %v356
  %v358 = vmul.f32 %v348, %v357
  %v359 = vmul.f32 %v350, %v357
  %360 = vset.pattern.permute.xlu0 6
  %361 = vperm.xlu0 %360, %v136
  %v362 = vpop.permute.xlu0 %361
  %364 = vset.pattern.permute.xlu0 6
  %365 = vperm.xlu0 %364, %v137
  %v366 = vpop.permute.xlu0 %365
  %v368 = vmul.f32 %v362, %v358
  %v369 = vmul.f32 %v366, %v359
  %v370 = vadd.f32 %v333, %v368
  %v371 = vadd.f32 %v334, %v369
  %372 = vset.pattern.permute.xlu0 15
  %373 = vperm.xlu0 %372, %v136
  %v374 = vpop.permute.xlu0 %373
  %376 = vset.pattern.permute.xlu0 15
  %377 = vperm.xlu0 %376, %v137
  %v378 = vpop.permute.xlu0 %377
  %v380 = vmul.f32 %v374, %v358
  %v381 = vmul.f32 %v378, %v359
  %v382 = vadd.f32 %v345, %v380
  %v383 = vadd.f32 %v346, %v381
  %384 = vrot.lane.b32.xlu0 %v133, 120
  %v385 = vpop.permute.xlu0 %384
  %386 = vrot.lane.b32.xlu0 %v135, 120
  %v387 = vpop.permute.xlu0 %386
  %v390 = vld [vmem:[%s4 + $0x7] sm:$0x1]
  %v391 = vlaneseq
  %v392 = vshrl.u32 %v391, 7
  %v393 = vsub.s32 0, %v392
  %v394 = vrot.slane %v390, %v393
  %v395 = vmul.f32 %v385, %v394
  %v396 = vmul.f32 %v387, %v394
  %397 = vset.pattern.permute.xlu0 7
  %398 = vperm.xlu0 %397, %v136
  %v399 = vpop.permute.xlu0 %398
  %401 = vset.pattern.permute.xlu0 7
  %402 = vperm.xlu0 %401, %v137
  %v403 = vpop.permute.xlu0 %402
  %v405 = vmul.f32 %v399, %v395
  %v406 = vmul.f32 %v403, %v396
  %v407 = vadd.f32 %v370, %v405
  %v408 = vadd.f32 %v371, %v406
  %409 = vset.pattern.permute.xlu0 16
  %410 = vperm.xlu0 %409, %v136
  %v411 = vpop.permute.xlu0 %410
  %413 = vset.pattern.permute.xlu0 16
  %414 = vperm.xlu0 %413, %v137
  %v415 = vpop.permute.xlu0 %414
  %v417 = vmul.f32 %v411, %v395
  %v418 = vmul.f32 %v415, %v396
  %v419 = vadd.f32 %v382, %v417
  %v420 = vadd.f32 %v383, %v418
  %421 = vrot.lane.b32.xlu0 %v133, 119
  %v422 = vpop.permute.xlu0 %421
  %423 = vrot.lane.b32.xlu0 %v135, 119
  %v424 = vpop.permute.xlu0 %423
  %v427 = vld [vmem:[%s4 + $0x8] sm:$0x1]
  %v428 = vlaneseq
  %v429 = vshrl.u32 %v428, 7
  %v430 = vsub.s32 0, %v429
  %v431 = vrot.slane %v427, %v430
  %v432 = vmul.f32 %v422, %v431
  %v433 = vmul.f32 %v424, %v431
  %434 = vset.pattern.permute.xlu0 8
  %435 = vperm.xlu0 %434, %v136
  %v436 = vpop.permute.xlu0 %435
  %438 = vset.pattern.permute.xlu0 8
  %439 = vperm.xlu0 %438, %v137
  %v440 = vpop.permute.xlu0 %439
  %v442 = vmul.f32 %v436, %v432
  %v443 = vmul.f32 %v440, %v433
  %v444 = vadd.f32 %v407, %v442
  %v445 = vadd.f32 %v408, %v443
  %446 = vset.pattern.permute.xlu0 17
  %447 = vperm.xlu0 %446, %v136
  %v448 = vpop.permute.xlu0 %447
  %450 = vset.pattern.permute.xlu0 17
  %451 = vperm.xlu0 %450, %v137
  %v452 = vpop.permute.xlu0 %451
  %v454 = vmul.f32 %v448, %v432
  %v455 = vmul.f32 %v452, %v433
  %v456 = vadd.f32 %v419, %v454
  %v457 = vadd.f32 %v420, %v455
  %v458 = vld [vmem:[%s6] sm:$0xff]
  %v459 = vld [vmem:[%s6 + $0x8] sm:$0xff]
  %vm460 = vcmask 261120
  %v462 = vsel %vm460, %v458, 0
  %v465 = vsel %vm460, %v459, 0
  %467 = vmatprep.subr.mxu0 0.0
  %468 = vmatpush1.msra.mxu0 %v444
  %469 = vmatprep.subr.mxu0 0.0
  %470 = vmatpush1.msra.mxu0 %v445
  %471 = vmatprep.subr.mxu0 0.0
  %472 = vmatpush1.msra.mxu0 %v456
  %473 = vmatprep.subr.mxu0 0.0
  %474 = vmatpush1.msra.mxu0 %v457
  %475 = vmatprep.subr.mxu0 0.0
  %476 = vmatpush1.msra.mxu0 0.0
  %477 = vmatprep.subr.mxu0 0.0
  %478 = vmatpush1.msra.mxu0 0.0
  %479 = vmatprep.subr.mxu0 0.0
  %480 = vmatpush1.msra.mxu0 0.0
  %481 = vmatprep.subr.mxu0 0.0
  %482 = vmatpush1.msra.mxu0 0.0
  %483 = vmatprep.subr.mxu0 0.0
  %484 = vmatpush1.msra.mxu0 0.0
  %485 = vmatprep.subr.mxu0 0.0
  %486 = vmatpush1.msra.mxu0 0.0
  %487 = vmatprep.subr.mxu0 0.0
  %488 = vmatpush1.msra.mxu0 0.0
  %489 = vmatprep.subr.mxu0 0.0
  %490 = vmatpush1.msra.mxu0 0.0
  %491 = vmatprep.subr.mxu0 0.0
  %492 = vmatpush1.msra.mxu0 0.0
  %493 = vmatprep.subr.mxu0 0.0
  %494 = vmatpush1.msra.mxu0 0.0
  %495 = vmatprep.subr.mxu0 0.0
  %496 = vmatpush1.msra.mxu0 0.0
  %497 = vmatprep.subr.mxu0 0.0
  %498 = vmatpush1.msra.mxu0 0.0
  %499 = vmatprep.subr.mxu0 0.0
  %500 = vmatpush1.msra.mxu0 0.0
  %501 = vmatprep.subr.mxu0 0.0
  %502 = vmatpush1.msra.mxu0 0.0
  %503 = vmatprep.subr.mxu0 0.0
  %504 = vmatpush1.msra.mxu0 0.0
  %505 = vmatprep.subr.mxu0 0.0
  %506 = vmatpush1.msra.mxu0 0.0
  %507 = vmatprep.subr.mxu0 0.0
  %508 = vmatpush1.msra.mxu0 0.0
  %509 = vmatprep.subr.mxu0 0.0
  %510 = vmatpush1.msra.mxu0 0.0
  %511 = vmatprep.subr.mxu0 0.0
  %512 = vmatpush1.msra.mxu0 0.0
  %513 = vmatprep.subr.mxu0 0.0
  %514 = vmatpush1.msra.mxu0 0.0
  %515 = vmatprep.subr.mxu0 0.0
  %516 = vmatpush1.msra.mxu0 0.0
  %517 = vmatprep.subr.mxu0 0.0
  %518 = vmatpush1.msra.mxu0 0.0
  %519 = vmatprep.subr.mxu0 0.0
  %520 = vmatpush1.msra.mxu0 0.0
  %521 = vmatprep.subr.mxu0 0.0
  %522 = vmatpush1.msra.mxu0 0.0
  %523 = vmatprep.subr.mxu0 0.0
  %524 = vmatpush1.msra.mxu0 0.0
  %525 = vmatprep.subr.mxu0 0.0
  %526 = vmatpush1.msra.mxu0 0.0
  %527 = vmatprep.subr.mxu0 0.0
  %528 = vmatpush1.msra.mxu0 0.0
  %529 = vmatprep.subr.mxu0 0.0
  %530 = vmatpush1.msra.mxu0 0.0
  %531 = vmatprep.mubr.f32.mxu0 0.0
  %532 = vmatmul.mubr.f32.gmra.mrb[0].mxu0 %v462
  %v533 = vpop.f32.mrb[0].mxu0
  %v534 = vadd.f32 0.0, %v533
  %v535 = vpop.f32.mrb[0].mxu0
  %536 = vmatprep.mubr.f32.mxu0 0.0
  %537 = vmatmul.mubr.f32.gmra.mrb[0].mxu0 %v465
  %v538 = vpop.f32.mrb[0].mxu0
  %v539 = vadd.f32 0.0, %v538
  %v540 = vpop.f32.mrb[0].mxu0
  %541 = vdwg.mxu0
  %542 = vst [vmem:[%s7] sm:$0xff] %v534
  %543 = vst [vmem:[%s7 + $0x8] sm:$0xff] %v539
  // Predicated region
  $region30: #{csp_bottleneck_forward.9} parent=0 // pred_check
    _
  $region31: #{csp_bottleneck_forward.9} parent=0 // pred_check_branch
    %545 = sbr.rel (0) target = $region33
  $region32: #{csp_bottleneck_forward.9} parent=0 // pred_region
    _
  $region33: #{csp_bottleneck_forward.9} parent=0 // pred_fallthru
    _
  // Predicated region
  $region34: #{csp_bottleneck_forward.9} parent=0 // pred_check
    _
  $region35: #{csp_bottleneck_forward.9} parent=0 // pred_check_branch
    %547 = sbr.rel (0) target = $region37
  $region36: #{csp_bottleneck_forward.9} parent=0 // pred_region
    _
  $region37: #{csp_bottleneck_forward.9} parent=0 // pred_fallthru
    _

</llo_original>
